<compile_context>
chip_gen: v7x
topology: tpu7x:2x2x1
jax: 0.10.0
libtpu: 0.0.40
codegen_flags: <defaults>
</compile_context>

<pallas_src>
import functools

import jax
import jax.numpy as jnp
from jax import lax
from jax.experimental import pallas as pl
from jax.experimental.pallas import tpu as pltpu


# ----------------------------------------------------------------------------
# Generation-aware VMEM budgeting
# ----------------------------------------------------------------------------
def _tpu_vmem_capacity_bytes():
    try:
        return int(pltpu.get_tpu_info().vmem_capacity_bytes)
    except Exception:
        # Conservative fallback: assume the smallest generation (v7x: 64 MiB/TC).
        return 64 * 1024 * 1024


_VMEM_CAP = _tpu_vmem_capacity_bytes()
# Scoped limit with headroom for compiler scratch / semaphores / spills:
#   ~40 MiB on v7x (64 MiB/TC), ~80 MiB on v5e/v6e (128 MiB), capped at 96 MiB.
_VMEM_LIMIT = min(_VMEM_CAP * 5 // 8, 96 * 1024 * 1024)
# Target working-set size used when deriving tile sizes.
_TILE_BUDGET = _VMEM_LIMIT * 3 // 4


def _round_up(n, m):
    return ((n + m - 1) // m) * m


def _pick_tile(dim, preferred, align=1):
    """Largest multiple-of-`align` divisor of `dim` that is <= `preferred`.

    Falls back to the full dim (always legal w.r.t. the (8,128) block rule)
    only when no aligned divisor exists.
    """
    if dim <= preferred:
        return dim
    t = (preferred // align) * align
    while t >= align:
        if dim % t == 0:
            return t
        t -= align
    return dim


# ----------------------------------------------------------------------------
# Tiled linear:  y = x @ w + b       x:(M,K)  w:(K,Nout)  b:(Nout,)
# MXU operands are bf16; accumulation/bias-add in f32; output cast to out_dtype.
# ----------------------------------------------------------------------------
def _linear_kernel(x_ref, w_ref, b_ref, o_ref, acc_ref):
    k = pl.program_id(2)

    @pl.when(k == 0)
    def _():
        acc_ref[...] = jnp.zeros_like(acc_ref)

    acc_ref[...] += jnp.dot(x_ref[...].astype(jnp.bfloat16),
                            w_ref[...].astype(jnp.bfloat16),
                            preferred_element_type=jnp.float32)

    @pl.when(k == pl.num_programs(2) - 1)
    def _():
        o_ref[...] = (acc_ref[...] + b_ref[...].astype(jnp.float32)
                      ).astype(o_ref.dtype)


def linear(x2d, w, b, *, out_dtype=None, tm=512, tn=512, tk=512):
    M, K = x2d.shape
    Nout = w.shape[1]
    out_dtype = out_dtype or x2d.dtype
    tm = _pick_tile(M, tm, 8)        # sublane dim of x/out blocks
    tn = _pick_tile(Nout, tn, 128)   # lane dim of w/out blocks
    tk = _pick_tile(K, tk, 128)      # lane dim of x block / sublane dim of w block

    flops = 2 * M * K * Nout
    bytes_accessed = (M * K * x2d.dtype.itemsize
                      + K * Nout * w.dtype.itemsize
                      + M * Nout * jnp.dtype(out_dtype).itemsize
                      + Nout * 4)

    return pl.pallas_call(
        _linear_kernel,
        grid=(M // tm, Nout // tn, K // tk),
        in_specs=[
            pl.BlockSpec((tm, tk), lambda i, j, k: (i, k)),
            pl.BlockSpec((tk, tn), lambda i, j, k: (k, j)),
            pl.BlockSpec((1, tn), lambda i, j, k: (0, j)),
        ],
        out_specs=pl.BlockSpec((tm, tn), lambda i, j, k: (i, j)),
        out_shape=jax.ShapeDtypeStruct((M, Nout), out_dtype),
        scratch_shapes=[pltpu.VMEM((tm, tn), jnp.float32)],
        compiler_params=pltpu.CompilerParams(
            dimension_semantics=("parallel", "parallel", "arbitrary"),
            vmem_limit_bytes=_VMEM_LIMIT),
        cost_estimate=pl.CostEstimate(flops=flops, transcendentals=0,
                                      bytes_accessed=bytes_accessed),
    )(x2d, w, b.reshape(1, Nout).astype(jnp.float32))


# ----------------------------------------------------------------------------
# Multi-head attention core.  Reads q/k/v straight out of the (B, N, 3, H, D)
# view of the QKV projection (no XLA transpose); outputs
#   attn (B, H, N, N)  in attn_dtype (module output)
#   ctx  (B, N, C)     head-packed bf16, ready to feed the plain `linear` proj.
# ----------------------------------------------------------------------------
def _attn_kernel(heads, head_dim, q_ref, k_ref, v_ref, attn_ref, ctx_ref):
    # q_ref: (tq, H, D)   k_ref, v_ref: (N, H, D)
    # attn_ref: (H, tq, N)   ctx_ref: (tq, C)  (head h -> columns h*D:(h+1)*D)
    # TODO(synk): attn_drop/proj_drop are identity (eval mode); no dropout in-kernel.
    # Static head unroll keeps the ctx column offsets (lane axis) static;
    # dynamic-lane stores are the alternative cost of a fori_loop here.
    # Per-head temporaries are bounded by the VMEM-budget-derived tq.
    for h in range(heads):
        q = q_ref[:, h, :].astype(jnp.bfloat16)   # scale already folded into W_q / b_q
        k = k_ref[:, h, :].astype(jnp.bfloat16)
        v = v_ref[:, h, :].astype(jnp.bfloat16)
        # scores: contract last dims of q and k (no explicit k.T / XLU transpose)
        s = lax.dot_general(q, k, (((1,), (1,)), ((), ())),
                            preferred_element_type=jnp.float32)  # (tq, N) f32
        # numerically stable softmax, strictly f32
        s = s - jnp.max(s, axis=-1, keepdims=True)
        e = jnp.exp(s)
        p = e * pl.reciprocal(jnp.sum(e, axis=-1, keepdims=True), approx=True)
        attn_ref[h, :, :] = p.astype(attn_ref.dtype)
        ctx = jnp.dot(p.astype(jnp.bfloat16), v, preferred_element_type=jnp.float32)
        ctx_ref[:, h * head_dim:(h + 1) * head_dim] = ctx.astype(ctx_ref.dtype)


def attention_core(qkv, heads, *, attn_dtype=jnp.float32, ctx_dtype=jnp.bfloat16,
                   tq_pref=512):
    B, N, _, H, D = qkv.shape
    C = H * D

    # ---- derive tq from the per-generation VMEM budget --------------------
    qb = qkv.dtype.itemsize
    ab = jnp.dtype(attn_dtype).itemsize
    cb = jnp.dtype(ctx_dtype).itemsize
    Hp = _round_up(H, 16)      # conservative sublane padding
    Dp = _round_up(D, 128)     # lane padding
    Np = _round_up(N, 128)
    Cp = _round_up(C, 128)
    # K and V blocks are full-N and double-buffered.
    # TODO(synk): stream K/V in key tiles (inner 'arbitrary' axis + online softmax)
    # to bound VMEM independent of N at very long sequence on v7x.
    fixed = 2 * 2 * N * Hp * Dp * qb
    per_tq = (2 * Hp * Dp * qb        # q block (double-buffered)
              + 2 * H * Np * ab       # attn output block (double-buffered)
              + 2 * Cp * cb           # ctx output block (double-buffered)
              + 2 * Np * 4)           # f32 per-head temporaries (slack)
    avail = max(_TILE_BUDGET - fixed, per_tq * 8)
    tq_cap = max(8, (avail // per_tq) // 8 * 8)
    tq = _pick_tile(N, min(tq_pref, int(tq_cap)), align=8)
    # v7x megacore: give both TensorCores work when possible.
    if B * (N // tq) < 2 and tq >= 16:
        tq = _pick_tile(N, max(8, tq // 2), align=8)

    q_spec = pl.BlockSpec((pl.Squeezed(), tq, pl.Squeezed(), H, D),
                          lambda b, i: (b, i, 0, 0, 0))
    k_spec = pl.BlockSpec((pl.Squeezed(), N, pl.Squeezed(), H, D),
                          lambda b, i: (b, 0, 1, 0, 0))
    v_spec = pl.BlockSpec((pl.Squeezed(), N, pl.Squeezed(), H, D),
                          lambda b, i: (b, 0, 2, 0, 0))
    attn_spec = pl.BlockSpec((pl.Squeezed(), H, tq, N), lambda b, i: (b, 0, i, 0))
    ctx_spec = pl.BlockSpec((pl.Squeezed(), tq, C), lambda b, i: (b, i, 0))

    flops = 4 * B * H * N * N * D
    transcendentals = B * H * N * N
    bytes_accessed = (B * N * 3 * C * qb + B * H * N * N * ab + B * N * C * cb)

    return pl.pallas_call(
        functools.partial(_attn_kernel, heads, D),
        grid=(B, N // tq),
        in_specs=[q_spec, k_spec, v_spec],
        out_specs=[attn_spec, ctx_spec],
        out_shape=(jax.ShapeDtypeStruct((B, H, N, N), attn_dtype),
                   jax.ShapeDtypeStruct((B, N, C), ctx_dtype)),
        compiler_params=pltpu.CompilerParams(
            dimension_semantics=("parallel", "parallel"),
            vmem_limit_bytes=_VMEM_LIMIT),
        cost_estimate=pl.CostEstimate(flops=flops,
                                      transcendentals=transcendentals,
                                      bytes_accessed=bytes_accessed),
    )(qkv, qkv, qkv)


# ----------------------------------------------------------------------------
# Module wrapper
# ----------------------------------------------------------------------------
def init_attention_params(key, dim):
    """Deterministic init mimicking nn.Linear defaults (uniform +/- 1/sqrt(fan_in))."""
    k1, k2, k3, k4 = jax.random.split(key, 4)
    bound = 1.0 / (dim ** 0.5)
    return {
        "w_qkv": jax.random.uniform(k1, (dim, 3 * dim), jnp.float32, -bound, bound),
        "b_qkv": jax.random.uniform(k2, (3 * dim,), jnp.float32, -bound, bound),
        "w_proj": jax.random.uniform(k3, (dim, dim), jnp.float32, -bound, bound),
        "b_proj": jax.random.uniform(k4, (dim,), jnp.float32, -bound, bound),
    }


def attention_forward(params, x, heads):
    """Pallas implementation of Attention.forward. Returns (out, attn)."""
    B, N, C = x.shape
    D = C // heads
    scale = float(D) ** -0.5

    # Fold the softmax scale into the Q columns of the QKV projection (frees
    # a per-element multiply from the attention kernel's VALU slots); weights
    # go to bf16 once here so the matmul kernels need no in-kernel weight cast.
    col_scale = jnp.concatenate(
        [jnp.full((C,), scale, jnp.float32), jnp.ones((2 * C,), jnp.float32)])
    w_qkv = (params["w_qkv"] * col_scale).astype(jnp.bfloat16)
    b_qkv = params["b_qkv"] * col_scale          # bias add stays f32 in-kernel
    w_proj = params["w_proj"].astype(jnp.bfloat16)
    b_proj = params["b_proj"]

    # QKV projection (tiled Pallas matmul) -> bf16 activations.
    qkv2d = linear(x.reshape(B * N, C), w_qkv, b_qkv,
                   out_dtype=jnp.bfloat16)                       # (B*N, 3C)
    qkv = qkv2d.reshape(B, N, 3, heads, D)                       # free row-major view

    # Scaled-dot-product attention; attn keeps x's dtype (module output),
    # ctx comes back head-packed (B, N, C) in bf16.
    attn, ctx = attention_core(qkv, heads, attn_dtype=x.dtype)

    # Output projection is the same plain tiled linear (K = C contraction).
    out2d = linear(ctx.reshape(B * N, C), w_proj, b_proj, out_dtype=x.dtype)
    # proj_drop is identity in eval mode.
    return out2d.reshape(B, N, C), attn


def attention_reference(params, x, heads):
    """Plain-JAX reference of the PyTorch forward pass."""
    B, N, C = x.shape
    D = C // heads
    scale = float(D) ** -0.5
    qkv = x @ params["w_qkv"] + params["b_qkv"]
    qkv = qkv.reshape(B, N, 3, heads, D).transpose(2, 0, 3, 1, 4)
    q, k, v = qkv[0], qkv[1], qkv[2]
    attn = jax.nn.softmax(jnp.einsum("bhnd,bhmd->bhnm", q, k) * scale, axis=-1)
    out = jnp.einsum("bhnm,bhmd->bhnd", attn, v).transpose(0, 2, 1, 3).reshape(B, N, C)
    out = out @ params["w_proj"] + params["b_proj"]
    return out, attn


if __name__ == "__main__":
    B, N, C, heads = 2, 8, 32, 4  # dim=32, heads=4, head_dim=8

    key = jax.random.PRNGKey(0)
    kp, kx = jax.random.split(key)
    params = init_attention_params(kp, C)
    x = jax.random.normal(kx, (B, N, C), jnp.float32)

    fwd = jax.jit(attention_forward, static_argnums=2)
    out, attn = fwd(params, x, heads)
    out = jax.block_until_ready(out)
    attn = jax.block_until_ready(attn)

    ref_out, ref_attn = attention_reference(params, x, heads)
    assert out.shape == (B, N, C) and attn.shape == (B, heads, N, N)
    # Tolerances loosened for bf16 MXU operands / bf16 qkv & ctx activations
    # and the approx-reciprocal softmax.
    assert jnp.allclose(out, ref_out, atol=5e-2, rtol=5e-2)
    assert jnp.allclose(attn, ref_attn, atol=2e-2, rtol=5e-2)

    print("KERNEL_OK")
</pallas_src>

<mosaic_0001>
module attributes {stable_mosaic.version = 11 : i64} {
  func.func @_linear_kernel(%arg0: i32, %arg1: i32, %arg2: i32, %arg3: memref<16x32xf32, #tpu.memory_space<vmem>>, %arg4: memref<32x96xbf16, #tpu.memory_space<vmem>>, %arg5: memref<1x96xf32, #tpu.memory_space<vmem>>, %arg6: memref<16x96xbf16, #tpu.memory_space<vmem>>, %arg7: memref<16x96xf32, #tpu.memory_space<vmem>>) attributes {dimension_semantics = [#tpu.dimension_semantics<parallel>, #tpu.dimension_semantics<parallel>, #tpu.dimension_semantics<arbitrary>], iteration_bounds = array<i64: 1, 1, 1>, scalar_prefetch = 0 : i64, scratch_operands = 1 : i64, tpu.core_type = #tpu.core_type<tc>, window_params = [{transform_indices = @transform_0, window_bounds = array<i64: 16, 32>}, {transform_indices = @transform_1, window_bounds = array<i64: 32, 96>}, {transform_indices = @transform_2, window_bounds = array<i64: 1, 96>}, {transform_indices = @transform_3, window_bounds = array<i64: 16, 96>}]} {
    %c0_i32 = arith.constant 0 : i32
    %0 = arith.cmpi eq, %arg2, %c0_i32 : i32
    %1 = arith.extui %0 : i1 to i32
    %c0_i32_0 = arith.constant 0 : i32
    %2 = arith.cmpi ne, %1, %c0_i32_0 : i32
    scf.if %2 {
      %cst_10 = arith.constant 0.000000e+00 : f32
      %13 = vector.broadcast %cst_10 : f32 to vector<16x96xf32>
      %c0_11 = arith.constant 0 : index
      %c0_12 = arith.constant 0 : index
      %14 = vector.load %arg7[%c0_11, %c0_12] : memref<16x96xf32, #tpu.memory_space<vmem>>, vector<16x96xf32>
      tpu.vector_store %arg7[%c0_11, %c0_12], %13 {strides = array<i32>} : memref<16x96xf32, #tpu.memory_space<vmem>>, vector<16x96xf32>,
    } else {
    }
    %c0 = arith.constant 0 : index
    %c0_1 = arith.constant 0 : index
    %3 = vector.load %arg7[%c0, %c0_1] : memref<16x96xf32, #tpu.memory_space<vmem>>, vector<16x96xf32>
    %c0_2 = arith.constant 0 : index
    %c0_3 = arith.constant 0 : index
    %4 = vector.load %arg3[%c0_2, %c0_3] : memref<16x32xf32, #tpu.memory_space<vmem>>, vector<16x32xf32>
    %5 = arith.truncf %4 : vector<16x32xf32> to vector<16x32xbf16>
    %c0_4 = arith.constant 0 : index
    %c0_5 = arith.constant 0 : index
    %6 = vector.load %arg4[%c0_4, %c0_5] : memref<32x96xbf16, #tpu.memory_space<vmem>>, vector<32x96xbf16>
    %cst = arith.constant dense<0.000000e+00> : vector<16x96xf32>
    %7 = tpu.matmul %5, %6, %cst {dimension_numbers = #tpu.dot_dimension_numbers<[1], [0], [0], [1], [0, 0, 1, 1], [], []>} : vector<16x32xbf16>, vector<32x96xbf16>, vector<16x96xf32> -> vector<16x96xf32>
    %8 = arith.addf %3, %7 : vector<16x96xf32>
    %c0_6 = arith.constant 0 : index
    %c0_7 = arith.constant 0 : index
    %9 = vector.load %arg7[%c0_6, %c0_7] : memref<16x96xf32, #tpu.memory_space<vmem>>, vector<16x96xf32>
    tpu.vector_store %arg7[%c0_6, %c0_7], %8 {strides = array<i32>} : memref<16x96xf32, #tpu.memory_space<vmem>>, vector<16x96xf32>,
    %c0_i32_8 = arith.constant 0 : i32
    %10 = arith.cmpi eq, %arg2, %c0_i32_8 : i32
    %11 = arith.extui %10 : i1 to i32
    %c0_i32_9 = arith.constant 0 : i32
    %12 = arith.cmpi ne, %11, %c0_i32_9 : i32
    scf.if %12 {
      %c0_10 = arith.constant 0 : index
      %c0_11 = arith.constant 0 : index
      %13 = vector.load %arg7[%c0_10, %c0_11] : memref<16x96xf32, #tpu.memory_space<vmem>>, vector<16x96xf32>
      %c0_12 = arith.constant 0 : index
      %c0_13 = arith.constant 0 : index
      %14 = vector.load %arg5[%c0_12, %c0_13] : memref<1x96xf32, #tpu.memory_space<vmem>>, vector<1x96xf32>
      %15 = vector.broadcast %14 : vector<1x96xf32> to vector<16x96xf32>
      %16 = arith.addf %13, %15 : vector<16x96xf32>
      %17 = arith.truncf %16 : vector<16x96xf32> to vector<16x96xbf16>
      %c0_14 = arith.constant 0 : index
      %c0_15 = arith.constant 0 : index
      %18 = vector.load %arg6[%c0_14, %c0_15] : memref<16x96xbf16, #tpu.memory_space<vmem>>, vector<16x96xbf16>
      tpu.vector_store %arg6[%c0_14, %c0_15], %17 {strides = array<i32>} : memref<16x96xbf16, #tpu.memory_space<vmem>>, vector<16x96xbf16>,
    } else {
    }
    return
  }
  func.func @transform_0(%arg0: i32, %arg1: i32, %arg2: i32) -> (i32, i32) {
    %c0_i32 = arith.constant 0 : i32
    return %arg0, %arg2 : i32, i32
  }
  func.func @transform_1(%arg0: i32, %arg1: i32, %arg2: i32) -> (i32, i32) {
    %c0_i32 = arith.constant 0 : i32
    return %arg2, %arg1 : i32, i32
  }
  func.func @transform_2(%arg0: i32, %arg1: i32, %arg2: i32) -> (i32, i32) {
    %c0_i32 = arith.constant 0 : i32
    %c0_i32_0 = arith.constant 0 : i32
    return %c0_i32, %arg1 : i32, i32
  }
  func.func @transform_3(%arg0: i32, %arg1: i32, %arg2: i32) -> (i32, i32) {
    %c0_i32 = arith.constant 0 : i32
    return %arg0, %arg1 : i32, i32
  }
}

module attributes {stable_mosaic.version = 11 : i64} {
  func.func @_linear_kernel(%arg0: i32, %arg1: i32, %arg2: i32, %arg3: memref<16x32xbf16, #tpu.memory_space<vmem>>, %arg4: memref<32x32xbf16, #tpu.memory_space<vmem>>, %arg5: memref<1x32xf32, #tpu.memory_space<vmem>>, %arg6: memref<16x32xf32, #tpu.memory_space<vmem>>, %arg7: memref<16x32xf32, #tpu.memory_space<vmem>>) attributes {dimension_semantics = [#tpu.dimension_semantics<parallel>, #tpu.dimension_semantics<parallel>, #tpu.dimension_semantics<arbitrary>], iteration_bounds = array<i64: 1, 1, 1>, scalar_prefetch = 0 : i64, scratch_operands = 1 : i64, tpu.core_type = #tpu.core_type<tc>, window_params = [{transform_indices = @transform_0, window_bounds = array<i64: 16, 32>}, {transform_indices = @transform_1, window_bounds = array<i64: 32, 32>}, {transform_indices = @transform_2, window_bounds = array<i64: 1, 32>}, {transform_indices = @transform_3, window_bounds = array<i64: 16, 32>}]} {
    %c0_i32 = arith.constant 0 : i32
    %0 = arith.cmpi eq, %arg2, %c0_i32 : i32
    %1 = arith.extui %0 : i1 to i32
    %c0_i32_0 = arith.constant 0 : i32
    %2 = arith.cmpi ne, %1, %c0_i32_0 : i32
    scf.if %2 {
      %cst_10 = arith.constant 0.000000e+00 : f32
      %12 = vector.broadcast %cst_10 : f32 to vector<16x32xf32>
      %c0_11 = arith.constant 0 : index
      %c0_12 = arith.constant 0 : index
      %13 = vector.load %arg7[%c0_11, %c0_12] : memref<16x32xf32, #tpu.memory_space<vmem>>, vector<16x32xf32>
      tpu.vector_store %arg7[%c0_11, %c0_12], %12 {strides = array<i32>} : memref<16x32xf32, #tpu.memory_space<vmem>>, vector<16x32xf32>,
    } else {
    }
    %c0 = arith.constant 0 : index
    %c0_1 = arith.constant 0 : index
    %3 = vector.load %arg7[%c0, %c0_1] : memref<16x32xf32, #tpu.memory_space<vmem>>, vector<16x32xf32>
    %c0_2 = arith.constant 0 : index
    %c0_3 = arith.constant 0 : index
    %4 = vector.load %arg3[%c0_2, %c0_3] : memref<16x32xbf16, #tpu.memory_space<vmem>>, vector<16x32xbf16>
    %c0_4 = arith.constant 0 : index
    %c0_5 = arith.constant 0 : index
    %5 = vector.load %arg4[%c0_4, %c0_5] : memref<32x32xbf16, #tpu.memory_space<vmem>>, vector<32x32xbf16>
    %cst = arith.constant dense<0.000000e+00> : vector<16x32xf32>
    %6 = tpu.matmul %4, %5, %cst {dimension_numbers = #tpu.dot_dimension_numbers<[1], [0], [0], [1], [0, 0, 1, 1], [], []>} : vector<16x32xbf16>, vector<32x32xbf16>, vector<16x32xf32> -> vector<16x32xf32>
    %7 = arith.addf %3, %6 : vector<16x32xf32>
    %c0_6 = arith.constant 0 : index
    %c0_7 = arith.constant 0 : index
    %8 = vector.load %arg7[%c0_6, %c0_7] : memref<16x32xf32, #tpu.memory_space<vmem>>, vector<16x32xf32>
    tpu.vector_store %arg7[%c0_6, %c0_7], %7 {strides = array<i32>} : memref<16x32xf32, #tpu.memory_space<vmem>>, vector<16x32xf32>,
    %c0_i32_8 = arith.constant 0 : i32
    %9 = arith.cmpi eq, %arg2, %c0_i32_8 : i32
    %10 = arith.extui %9 : i1 to i32
    %c0_i32_9 = arith.constant 0 : i32
    %11 = arith.cmpi ne, %10, %c0_i32_9 : i32
    scf.if %11 {
      %c0_10 = arith.constant 0 : index
      %c0_11 = arith.constant 0 : index
      %12 = vector.load %arg7[%c0_10, %c0_11] : memref<16x32xf32, #tpu.memory_space<vmem>>, vector<16x32xf32>
      %c0_12 = arith.constant 0 : index
      %c0_13 = arith.constant 0 : index
      %13 = vector.load %arg5[%c0_12, %c0_13] : memref<1x32xf32, #tpu.memory_space<vmem>>, vector<1x32xf32>
      %14 = vector.broadcast %13 : vector<1x32xf32> to vector<16x32xf32>
      %15 = arith.addf %12, %14 : vector<16x32xf32>
      %c0_14 = arith.constant 0 : index
      %c0_15 = arith.constant 0 : index
      %16 = vector.load %arg6[%c0_14, %c0_15] : memref<16x32xf32, #tpu.memory_space<vmem>>, vector<16x32xf32>
      tpu.vector_store %arg6[%c0_14, %c0_15], %15 {strides = array<i32>} : memref<16x32xf32, #tpu.memory_space<vmem>>, vector<16x32xf32>,
    } else {
    }
    return
  }
  func.func @transform_0(%arg0: i32, %arg1: i32, %arg2: i32) -> (i32, i32) {
    %c0_i32 = arith.constant 0 : i32
    return %arg0, %arg2 : i32, i32
  }
  func.func @transform_1(%arg0: i32, %arg1: i32, %arg2: i32) -> (i32, i32) {
    %c0_i32 = arith.constant 0 : i32
    return %arg2, %arg1 : i32, i32
  }
  func.func @transform_2(%arg0: i32, %arg1: i32, %arg2: i32) -> (i32, i32) {
    %c0_i32 = arith.constant 0 : i32
    %c0_i32_0 = arith.constant 0 : i32
    return %c0_i32, %arg1 : i32, i32
  }
  func.func @transform_3(%arg0: i32, %arg1: i32, %arg2: i32) -> (i32, i32) {
    %c0_i32 = arith.constant 0 : i32
    return %arg0, %arg1 : i32, i32
  }
}

module attributes {stable_mosaic.version = 11 : i64} {
  func.func @_attn_kernel(%arg0: i32, %arg1: i32, %arg2: memref<1x8x1x4x8xbf16, #tpu.memory_space<vmem>>, %arg3: memref<1x8x1x4x8xbf16, #tpu.memory_space<vmem>>, %arg4: memref<1x8x1x4x8xbf16, #tpu.memory_space<vmem>>, %arg5: memref<1x4x8x8xf32, #tpu.memory_space<vmem>>, %arg6: memref<1x8x32xbf16, #tpu.memory_space<vmem>>) attributes {dimension_semantics = [#tpu.dimension_semantics<parallel>, #tpu.dimension_semantics<parallel>], iteration_bounds = array<i64: 2, 1>, scalar_prefetch = 0 : i64, scratch_operands = 0 : i64, tpu.core_type = #tpu.core_type<tc>, window_params = [{transform_indices = @transform_0, window_bounds = array<i64: 1, 8, 1, 4, 8>}, {transform_indices = @transform_1, window_bounds = array<i64: 1, 8, 1, 4, 8>}, {transform_indices = @transform_2, window_bounds = array<i64: 1, 8, 1, 4, 8>}, {transform_indices = @transform_3, window_bounds = array<i64: 1, 4, 8, 8>}, {transform_indices = @transform_4, window_bounds = array<i64: 1, 8, 32>}]} {
    %c0 = arith.constant 0 : index
    %c0_0 = arith.constant 0 : index
    %c0_1 = arith.constant 0 : index
    %c0_2 = arith.constant 0 : index
    %c0_3 = arith.constant 0 : index
    %0 = vector.load %arg2[%c0, %c0_0, %c0_1, %c0_2, %c0_3] : memref<1x8x1x4x8xbf16, #tpu.memory_space<vmem>>, vector<1x8x1x1x8xbf16>
    %1 = vector.shape_cast %0 : vector<1x8x1x1x8xbf16> to vector<8x8xbf16>
    %c0_4 = arith.constant 0 : index
    %c0_5 = arith.constant 0 : index
    %c0_6 = arith.constant 0 : index
    %c0_7 = arith.constant 0 : index
    %c0_8 = arith.constant 0 : index
    %2 = vector.load %arg3[%c0_4, %c0_5, %c0_6, %c0_7, %c0_8] : memref<1x8x1x4x8xbf16, #tpu.memory_space<vmem>>, vector<1x8x1x1x8xbf16>
    %3 = vector.shape_cast %2 : vector<1x8x1x1x8xbf16> to vector<8x8xbf16>
    %c0_9 = arith.constant 0 : index
    %c0_10 = arith.constant 0 : index
    %c0_11 = arith.constant 0 : index
    %c0_12 = arith.constant 0 : index
    %c0_13 = arith.constant 0 : index
    %4 = vector.load %arg4[%c0_9, %c0_10, %c0_11, %c0_12, %c0_13] : memref<1x8x1x4x8xbf16, #tpu.memory_space<vmem>>, vector<1x8x1x1x8xbf16>
    %5 = vector.shape_cast %4 : vector<1x8x1x1x8xbf16> to vector<8x8xbf16>
    %cst = arith.constant dense<0.000000e+00> : vector<8x8xf32>
    %6 = tpu.matmul %1, %3, %cst {dimension_numbers = #tpu.dot_dimension_numbers<[1], [1], [0], [0], [0, 0, 1, 0], [], []>} : vector<8x8xbf16>, vector<8x8xbf16>, vector<8x8xf32> -> vector<8x8xf32>
    %cst_14 = arith.constant dense<0xFF800000> : vector<8xf32>
    %7 = vector.multi_reduction <maximumf>, %6, %cst_14 [1] : vector<8x8xf32> to vector<8xf32>
    %8 = vector.shape_cast %7 : vector<8xf32> to vector<8x1xf32>
    %9 = vector.broadcast %8 : vector<8x1xf32> to vector<8x8xf32>
    %10 = arith.subf %6, %9 : vector<8x8xf32>
    %11 = math.exp %10 : vector<8x8xf32>
    %cst_15 = arith.constant dense<0.000000e+00> : vector<8xf32>
    %12 = vector.multi_reduction <add>, %11, %cst_15 [1] : vector<8x8xf32> to vector<8xf32>
    %13 = vector.shape_cast %12 : vector<8xf32> to vector<8x1xf32>
    %14 = tpu.reciprocal %13 {approx = true} : vector<8x1xf32> -> vector<8x1xf32>
    %15 = vector.broadcast %14 : vector<8x1xf32> to vector<8x8xf32>
    %16 = arith.mulf %11, %15 : vector<8x8xf32>
    %c0_16 = arith.constant 0 : index
    %c0_17 = arith.constant 0 : index
    %c0_18 = arith.constant 0 : index
    %c0_19 = arith.constant 0 : index
    %17 = vector.load %arg5[%c0_16, %c0_17, %c0_18, %c0_19] : memref<1x4x8x8xf32, #tpu.memory_space<vmem>>, vector<1x1x8x8xf32>
    %18 = vector.shape_cast %17 : vector<1x1x8x8xf32> to vector<8x8xf32>
    %19 = vector.shape_cast %16 : vector<8x8xf32> to vector<1x1x8x8xf32>
    tpu.vector_store %arg5[%c0_16, %c0_17, %c0_18, %c0_19], %19 {strides = array<i32>} : memref<1x4x8x8xf32, #tpu.memory_space<vmem>>, vector<1x1x8x8xf32>,
    %20 = arith.truncf %16 : vector<8x8xf32> to vector<8x8xbf16>
    %cst_20 = arith.constant dense<0.000000e+00> : vector<8x8xf32>
    %21 = tpu.matmul %20, %5, %cst_20 {dimension_numbers = #tpu.dot_dimension_numbers<[1], [0], [0], [1], [0, 0, 1, 1], [], []>} : vector<8x8xbf16>, vector<8x8xbf16>, vector<8x8xf32> -> vector<8x8xf32>
    %22 = arith.truncf %21 : vector<8x8xf32> to vector<8x8xbf16>
    %c0_21 = arith.constant 0 : index
    %c0_22 = arith.constant 0 : index
    %c0_23 = arith.constant 0 : index
    %23 = vector.load %arg6[%c0_21, %c0_22, %c0_23] : memref<1x8x32xbf16, #tpu.memory_space<vmem>>, vector<1x8x8xbf16>
    %24 = vector.shape_cast %23 : vector<1x8x8xbf16> to vector<8x8xbf16>
    %25 = vector.shape_cast %22 : vector<8x8xbf16> to vector<1x8x8xbf16>
    tpu.vector_store %arg6[%c0_21, %c0_22, %c0_23], %25 {strides = array<i32>} : memref<1x8x32xbf16, #tpu.memory_space<vmem>>, vector<1x8x8xbf16>,
    %c0_24 = arith.constant 0 : index
    %c0_25 = arith.constant 0 : index
    %c0_26 = arith.constant 0 : index
    %c1 = arith.constant 1 : index
    %c0_27 = arith.constant 0 : index
    %26 = vector.load %arg2[%c0_24, %c0_25, %c0_26, %c1, %c0_27] : memref<1x8x1x4x8xbf16, #tpu.memory_space<vmem>>, vector<1x8x1x1x8xbf16>
    %27 = vector.shape_cast %26 : vector<1x8x1x1x8xbf16> to vector<8x8xbf16>
    %c0_28 = arith.constant 0 : index
    %c0_29 = arith.constant 0 : index
    %c0_30 = arith.constant 0 : index
    %c1_31 = arith.constant 1 : index
    %c0_32 = arith.constant 0 : index
    %28 = vector.load %arg3[%c0_28, %c0_29, %c0_30, %c1_31, %c0_32] : memref<1x8x1x4x8xbf16, #tpu.memory_space<vmem>>, vector<1x8x1x1x8xbf16>
    %29 = vector.shape_cast %28 : vector<1x8x1x1x8xbf16> to vector<8x8xbf16>
    %c0_33 = arith.constant 0 : index
    %c0_34 = arith.constant 0 : index
    %c0_35 = arith.constant 0 : index
    %c1_36 = arith.constant 1 : index
    %c0_37 = arith.constant 0 : index
    %30 = vector.load %arg4[%c0_33, %c0_34, %c0_35, %c1_36, %c0_37] : memref<1x8x1x4x8xbf16, #tpu.memory_space<vmem>>, vector<1x8x1x1x8xbf16>
    %31 = vector.shape_cast %30 : vector<1x8x1x1x8xbf16> to vector<8x8xbf16>
    %cst_38 = arith.constant dense<0.000000e+00> : vector<8x8xf32>
    %32 = tpu.matmul %27, %29, %cst_38 {dimension_numbers = #tpu.dot_dimension_numbers<[1], [1], [0], [0], [0, 0, 1, 0], [], []>} : vector<8x8xbf16>, vector<8x8xbf16>, vector<8x8xf32> -> vector<8x8xf32>
    %cst_39 = arith.constant dense<0xFF800000> : vector<8xf32>
    %33 = vector.multi_reduction <maximumf>, %32, %cst_39 [1] : vector<8x8xf32> to vector<8xf32>
    %34 = vector.shape_cast %33 : vector<8xf32> to vector<8x1xf32>
    %35 = vector.broadcast %34 : vector<8x1xf32> to vector<8x8xf32>
    %36 = arith.subf %32, %35 : vector<8x8xf32>
    %37 = math.exp %36 : vector<8x8xf32>
    %cst_40 = arith.constant dense<0.000000e+00> : vector<8xf32>
    %38 = vector.multi_reduction <add>, %37, %cst_40 [1] : vector<8x8xf32> to vector<8xf32>
    %39 = vector.shape_cast %38 : vector<8xf32> to vector<8x1xf32>
    %40 = tpu.reciprocal %39 {approx = true} : vector<8x1xf32> -> vector<8x1xf32>
    %41 = vector.broadcast %40 : vector<8x1xf32> to vector<8x8xf32>
    %42 = arith.mulf %37, %41 : vector<8x8xf32>
    %c0_41 = arith.constant 0 : index
    %c1_42 = arith.constant 1 : index
    %c0_43 = arith.constant 0 : index
    %c0_44 = arith.constant 0 : index
    %43 = vector.load %arg5[%c0_41, %c1_42, %c0_43, %c0_44] : memref<1x4x8x8xf32, #tpu.memory_space<vmem>>, vector<1x1x8x8xf32>
    %44 = vector.shape_cast %43 : vector<1x1x8x8xf32> to vector<8x8xf32>
    %45 = vector.shape_cast %42 : vector<8x8xf32> to vector<1x1x8x8xf32>
    tpu.vector_store %arg5[%c0_41, %c1_42, %c0_43, %c0_44], %45 {strides = array<i32>} : memref<1x4x8x8xf32, #tpu.memory_space<vmem>>, vector<1x1x8x8xf32>,
    %46 = arith.truncf %42 : vector<8x8xf32> to vector<8x8xbf16>
    %cst_45 = arith.constant dense<0.000000e+00> : vector<8x8xf32>
    %47 = tpu.matmul %46, %31, %cst_45 {dimension_numbers = #tpu.dot_dimension_numbers<[1], [0], [0], [1], [0, 0, 1, 1], [], []>} : vector<8x8xbf16>, vector<8x8xbf16>, vector<8x8xf32> -> vector<8x8xf32>
    %48 = arith.truncf %47 : vector<8x8xf32> to vector<8x8xbf16>
    %c0_46 = arith.constant 0 : index
    %c0_47 = arith.constant 0 : index
    %c8 = arith.constant 8 : index
    %49 = vector.load %arg6[%c0_46, %c0_47, %c8] : memref<1x8x32xbf16, #tpu.memory_space<vmem>>, vector<1x8x8xbf16>
    %50 = vector.shape_cast %49 : vector<1x8x8xbf16> to vector<8x8xbf16>
    %51 = vector.shape_cast %48 : vector<8x8xbf16> to vector<1x8x8xbf16>
    tpu.vector_store %arg6[%c0_46, %c0_47, %c8], %51 {strides = array<i32>} : memref<1x8x32xbf16, #tpu.memory_space<vmem>>, vector<1x8x8xbf16>,
    %c0_48 = arith.constant 0 : index
    %c0_49 = arith.constant 0 : index
    %c0_50 = arith.constant 0 : index
    %c2 = arith.constant 2 : index
    %c0_51 = arith.constant 0 : index
    %52 = vector.load %arg2[%c0_48, %c0_49, %c0_50, %c2, %c0_51] : memref<1x8x1x4x8xbf16, #tpu.memory_space<vmem>>, vector<1x8x1x1x8xbf16>
    %53 = vector.shape_cast %52 : vector<1x8x1x1x8xbf16> to vector<8x8xbf16>
    %c0_52 = arith.constant 0 : index
    %c0_53 = arith.constant 0 : index
    %c0_54 = arith.constant 0 : index
    %c2_55 = arith.constant 2 : index
    %c0_56 = arith.constant 0 : index
    %54 = vector.load %arg3[%c0_52, %c0_53, %c0_54, %c2_55, %c0_56] : memref<1x8x1x4x8xbf16, #tpu.memory_space<vmem>>, vector<1x8x1x1x8xbf16>
    %55 = vector.shape_cast %54 : vector<1x8x1x1x8xbf16> to vector<8x8xbf16>
    %c0_57 = arith.constant 0 : index
    %c0_58 = arith.constant 0 : index
    %c0_59 = arith.constant 0 : index
    %c2_60 = arith.constant 2 : index
    %c0_61 = arith.constant 0 : index
    %56 = vector.load %arg4[%c0_57, %c0_58, %c0_59, %c2_60, %c0_61] : memref<1x8x1x4x8xbf16, #tpu.memory_space<vmem>>, vector<1x8x1x1x8xbf16>
    %57 = vector.shape_cast %56 : vector<1x8x1x1x8xbf16> to vector<8x8xbf16>
    %cst_62 = arith.constant dense<0.000000e+00> : vector<8x8xf32>
    %58 = tpu.matmul %53, %55, %cst_62 {dimension_numbers = #tpu.dot_dimension_numbers<[1], [1], [0], [0], [0, 0, 1, 0], [], []>} : vector<8x8xbf16>, vector<8x8xbf16>, vector<8x8xf32> -> vector<8x8xf32>
    %cst_63 = arith.constant dense<0xFF800000> : vector<8xf32>
    %59 = vector.multi_reduction <maximumf>, %58, %cst_63 [1] : vector<8x8xf32> to vector<8xf32>
    %60 = vector.shape_cast %59 : vector<8xf32> to vector<8x1xf32>
    %61 = vector.broadcast %60 : vector<8x1xf32> to vector<8x8xf32>
    %62 = arith.subf %58, %61 : vector<8x8xf32>
    %63 = math.exp %62 : vector<8x8xf32>
    %cst_64 = arith.constant dense<0.000000e+00> : vector<8xf32>
    %64 = vector.multi_reduction <add>, %63, %cst_64 [1] : vector<8x8xf32> to vector<8xf32>
    %65 = vector.shape_cast %64 : vector<8xf32> to vector<8x1xf32>
    %66 = tpu.reciprocal %65 {approx = true} : vector<8x1xf32> -> vector<8x1xf32>
    %67 = vector.broadcast %66 : vector<8x1xf32> to vector<8x8xf32>
    %68 = arith.mulf %63, %67 : vector<8x8xf32>
    %c0_65 = arith.constant 0 : index
    %c2_66 = arith.constant 2 : index
    %c0_67 = arith.constant 0 : index
    %c0_68 = arith.constant 0 : index
    %69 = vector.load %arg5[%c0_65, %c2_66, %c0_67, %c0_68] : memref<1x4x8x8xf32, #tpu.memory_space<vmem>>, vector<1x1x8x8xf32>
    %70 = vector.shape_cast %69 : vector<1x1x8x8xf32> to vector<8x8xf32>
    %71 = vector.shape_cast %68 : vector<8x8xf32> to vector<1x1x8x8xf32>
    tpu.vector_store %arg5[%c0_65, %c2_66, %c0_67, %c0_68], %71 {strides = array<i32>} : memref<1x4x8x8xf32, #tpu.memory_space<vmem>>, vector<1x1x8x8xf32>,
    %72 = arith.truncf %68 : vector<8x8xf32> to vector<8x8xbf16>
    %cst_69 = arith.constant dense<0.000000e+00> : vector<8x8xf32>
    %73 = tpu.matmul %72, %57, %cst_69 {dimension_numbers = #tpu.dot_dimension_numbers<[1], [0], [0], [1], [0, 0, 1, 1], [], []>} : vector<8x8xbf16>, vector<8x8xbf16>, vector<8x8xf32> -> vector<8x8xf32>
    %74 = arith.truncf %73 : vector<8x8xf32> to vector<8x8xbf16>
    %c0_70 = arith.constant 0 : index
    %c0_71 = arith.constant 0 : index
    %c16 = arith.constant 16 : index
    %75 = vector.load %arg6[%c0_70, %c0_71, %c16] : memref<1x8x32xbf16, #tpu.memory_space<vmem>>, vector<1x8x8xbf16>
    %76 = vector.shape_cast %75 : vector<1x8x8xbf16> to vector<8x8xbf16>
    %77 = vector.shape_cast %74 : vector<8x8xbf16> to vector<1x8x8xbf16>
    tpu.vector_store %arg6[%c0_70, %c0_71, %c16], %77 {strides = array<i32>} : memref<1x8x32xbf16, #tpu.memory_space<vmem>>, vector<1x8x8xbf16>,
    %c0_72 = arith.constant 0 : index
    %c0_73 = arith.constant 0 : index
    %c0_74 = arith.constant 0 : index
    %c3 = arith.constant 3 : index
    %c0_75 = arith.constant 0 : index
    %78 = vector.load %arg2[%c0_72, %c0_73, %c0_74, %c3, %c0_75] : memref<1x8x1x4x8xbf16, #tpu.memory_space<vmem>>, vector<1x8x1x1x8xbf16>
    %79 = vector.shape_cast %78 : vector<1x8x1x1x8xbf16> to vector<8x8xbf16>
    %c0_76 = arith.constant 0 : index
    %c0_77 = arith.constant 0 : index
    %c0_78 = arith.constant 0 : index
    %c3_79 = arith.constant 3 : index
    %c0_80 = arith.constant 0 : index
    %80 = vector.load %arg3[%c0_76, %c0_77, %c0_78, %c3_79, %c0_80] : memref<1x8x1x4x8xbf16, #tpu.memory_space<vmem>>, vector<1x8x1x1x8xbf16>
    %81 = vector.shape_cast %80 : vector<1x8x1x1x8xbf16> to vector<8x8xbf16>
    %c0_81 = arith.constant 0 : index
    %c0_82 = arith.constant 0 : index
    %c0_83 = arith.constant 0 : index
    %c3_84 = arith.constant 3 : index
    %c0_85 = arith.constant 0 : index
    %82 = vector.load %arg4[%c0_81, %c0_82, %c0_83, %c3_84, %c0_85] : memref<1x8x1x4x8xbf16, #tpu.memory_space<vmem>>, vector<1x8x1x1x8xbf16>
    %83 = vector.shape_cast %82 : vector<1x8x1x1x8xbf16> to vector<8x8xbf16>
    %cst_86 = arith.constant dense<0.000000e+00> : vector<8x8xf32>
    %84 = tpu.matmul %79, %81, %cst_86 {dimension_numbers = #tpu.dot_dimension_numbers<[1], [1], [0], [0], [0, 0, 1, 0], [], []>} : vector<8x8xbf16>, vector<8x8xbf16>, vector<8x8xf32> -> vector<8x8xf32>
    %cst_87 = arith.constant dense<0xFF800000> : vector<8xf32>
    %85 = vector.multi_reduction <maximumf>, %84, %cst_87 [1] : vector<8x8xf32> to vector<8xf32>
    %86 = vector.shape_cast %85 : vector<8xf32> to vector<8x1xf32>
    %87 = vector.broadcast %86 : vector<8x1xf32> to vector<8x8xf32>
    %88 = arith.subf %84, %87 : vector<8x8xf32>
    %89 = math.exp %88 : vector<8x8xf32>
    %cst_88 = arith.constant dense<0.000000e+00> : vector<8xf32>
    %90 = vector.multi_reduction <add>, %89, %cst_88 [1] : vector<8x8xf32> to vector<8xf32>
    %91 = vector.shape_cast %90 : vector<8xf32> to vector<8x1xf32>
    %92 = tpu.reciprocal %91 {approx = true} : vector<8x1xf32> -> vector<8x1xf32>
    %93 = vector.broadcast %92 : vector<8x1xf32> to vector<8x8xf32>
    %94 = arith.mulf %89, %93 : vector<8x8xf32>
    %c0_89 = arith.constant 0 : index
    %c3_90 = arith.constant 3 : index
    %c0_91 = arith.constant 0 : index
    %c0_92 = arith.constant 0 : index
    %95 = vector.load %arg5[%c0_89, %c3_90, %c0_91, %c0_92] : memref<1x4x8x8xf32, #tpu.memory_space<vmem>>, vector<1x1x8x8xf32>
    %96 = vector.shape_cast %95 : vector<1x1x8x8xf32> to vector<8x8xf32>
    %97 = vector.shape_cast %94 : vector<8x8xf32> to vector<1x1x8x8xf32>
    tpu.vector_store %arg5[%c0_89, %c3_90, %c0_91, %c0_92], %97 {strides = array<i32>} : memref<1x4x8x8xf32, #tpu.memory_space<vmem>>, vector<1x1x8x8xf32>,
    %98 = arith.truncf %94 : vector<8x8xf32> to vector<8x8xbf16>
    %cst_93 = arith.constant dense<0.000000e+00> : vector<8x8xf32>
    %99 = tpu.matmul %98, %83, %cst_93 {dimension_numbers = #tpu.dot_dimension_numbers<[1], [0], [0], [1], [0, 0, 1, 1], [], []>} : vector<8x8xbf16>, vector<8x8xbf16>, vector<8x8xf32> -> vector<8x8xf32>
    %100 = arith.truncf %99 : vector<8x8xf32> to vector<8x8xbf16>
    %c0_94 = arith.constant 0 : index
    %c0_95 = arith.constant 0 : index
    %c24 = arith.constant 24 : index
    %101 = vector.load %arg6[%c0_94, %c0_95, %c24] : memref<1x8x32xbf16, #tpu.memory_space<vmem>>, vector<1x8x8xbf16>
    %102 = vector.shape_cast %101 : vector<1x8x8xbf16> to vector<8x8xbf16>
    %103 = vector.shape_cast %100 : vector<8x8xbf16> to vector<1x8x8xbf16>
    tpu.vector_store %arg6[%c0_94, %c0_95, %c24], %103 {strides = array<i32>} : memref<1x8x32xbf16, #tpu.memory_space<vmem>>, vector<1x8x8xbf16>,
    return
  }
  func.func @transform_0(%arg0: i32, %arg1: i32) -> (i32, i32, i32, i32, i32) {
    %c0_i32 = arith.constant 0 : i32
    %c0_i32_0 = arith.constant 0 : i32
    %c0_i32_1 = arith.constant 0 : i32
    %c0_i32_2 = arith.constant 0 : i32
    return %arg0, %arg1, %c0_i32, %c0_i32_0, %c0_i32_1 : i32, i32, i32, i32, i32
  }
  func.func @transform_1(%arg0: i32, %arg1: i32) -> (i32, i32, i32, i32, i32) {
    %c0_i32 = arith.constant 0 : i32
    %c1_i32 = arith.constant 1 : i32
    %c0_i32_0 = arith.constant 0 : i32
    %c0_i32_1 = arith.constant 0 : i32
    %c0_i32_2 = arith.constant 0 : i32
    return %arg0, %c0_i32, %c1_i32, %c0_i32_0, %c0_i32_1 : i32, i32, i32, i32, i32
  }
  func.func @transform_2(%arg0: i32, %arg1: i32) -> (i32, i32, i32, i32, i32) {
    %c0_i32 = arith.constant 0 : i32
    %c2_i32 = arith.constant 2 : i32
    %c0_i32_0 = arith.constant 0 : i32
    %c0_i32_1 = arith.constant 0 : i32
    %c0_i32_2 = arith.constant 0 : i32
    return %arg0, %c0_i32, %c2_i32, %c0_i32_0, %c0_i32_1 : i32, i32, i32, i32, i32
  }
  func.func @transform_3(%arg0: i32, %arg1: i32) -> (i32, i32, i32, i32) {
    %c0_i32 = arith.constant 0 : i32
    %c0_i32_0 = arith.constant 0 : i32
    %c0_i32_1 = arith.constant 0 : i32
    return %arg0, %c0_i32, %arg1, %c0_i32_0 : i32, i32, i32, i32
  }
  func.func @transform_4(%arg0: i32, %arg1: i32) -> (i32, i32, i32) {
    %c0_i32 = arith.constant 0 : i32
    %c0_i32_0 = arith.constant 0 : i32
    return %arg0, %arg1, %c0_i32 : i32, i32, i32
  }
}

</mosaic_0001>

<llo_original>
// kernel: attention_forward.5
$region0: #{attention_forward.5}
  #allocation0 [shape = 'u32[]', space=smem, size = 0x4, offset = 0x4, fixed_abs, tag = 'smem constant byte address 0x4 - core index']
  #allocation1 [shape = 'u32[144,128]{1,0:T(1,128)}', space=vmem, size = 0x12000, scoped, tag = 'internal scratch']
  #allocation2 [shape = 'f32[16,32]{1,0:T(8,128)}', space=vmem, size = 0x2000, scoped, tag = 'scratch operand']
  %s0 = inlined_call_operand.vmem [shape: bf16[16,32], index: 0, kind: input, shape index: {}]
  %s1 = inlined_call_operand.vmem [shape: bf16[32,32], index: 1, kind: input, shape index: {}]
  %s2 = inlined_call_operand.vmem [shape: f32[1,32], index: 2, kind: input, shape index: {}]
  %s3 = inlined_call_operand.hbm [shape: f32[16,32], index: 3, kind: output, shape index: {}]
  %s4 = sld [smem:[#allocation0]]
  $region30: #{attention_forward.5} parent=0
    _
  %s6 = ssub.s32 1, %s4
  %s7 = scalar_select 0, %s6, %s4
  $region1: #{attention_forward.5} parent=0
    #allocation3 [shape = 'u8[8192]{0}', space=vmem, size = 0x2000, scoped, tag = 'output window, operand 0, single buffered']
    #allocation4 [shape = 's32[1]{0}', space=sflag, size = 0x4, scoped, tag = 'scoped memory for attention_forward.5']
    %8 = vsyncpa [#allocation4], 0
    // Predicated region
    $region2: #{attention_forward.5} parent=1 // pred_check
      _
    $region3: #{attention_forward.5} parent=1 // pred_check_branch
      %10 = sbr.rel (0) target = $region5
    $region4: #{attention_forward.5} parent=1 // pred_region
      _
    $region5: #{attention_forward.5} parent=1 // pred_fallthru
      _
    // Predicated region
    $region6: #{attention_forward.5} parent=1 // pred_check
      _
    $region7: #{attention_forward.5} parent=1 // pred_check_branch
      %12 = sbr.rel (0) target = $region9
    $region8: #{attention_forward.5} parent=1 // pred_region
      _
    $region9: #{attention_forward.5} parent=1 // pred_fallthru
      _
    // Predicated region
    $region10: #{attention_forward.5} parent=1 // pred_check
      _
    $region11: #{attention_forward.5} parent=1 // pred_check_branch
      %14 = sbr.rel (0) target = $region13
    $region12: #{attention_forward.5} parent=1 // pred_region
      _
    $region13: #{attention_forward.5} parent=1 // pred_fallthru
      _
    %p16 = scmp.eq.s32.totalorder 0, 0
    // Predicated region
    $region14: #{attention_forward.5} parent=1 // pred_check
      %p17 = pneg %p16
    $region15: #{attention_forward.5} parent=1 // pred_check_branch
      %19 = sbr.rel (%p17) target = $region17
    $region16: #{attention_forward.5} parent=1 // pred_region
      %vm20 = vcmask 261120
      %21 = vst.msk [vmem:[#allocation2] sm:$0xff] %vm20, 0.0
      %22 = vst.msk [vmem:[#allocation2 + $0x8] sm:$0xff] %vm20, 0.0
    $region17: #{attention_forward.5} parent=1 // pred_fallthru
      _
    %v23 = vld [vmem:[#allocation2] sm:$0xff]
    %v24 = vld [vmem:[#allocation2 + $0x8] sm:$0xff]
    %v25 = vld [vmem:[%s0] sm:$0xf]
    %v26 = vld [vmem:[%s0 + $0x4] sm:$0xf]
    %v27 = vld [vmem:[%s1] sm:$0xf]
    %v28 = vld [vmem:[%s1 + $0x4] sm:$0xf]
    %v29 = vld [vmem:[%s1 + $0x8] sm:$0xf]
    %v30 = vld [vmem:[%s1 + $0xc] sm:$0xf]
    %v33 = vunpack.c.l.b16 %v25
    %v34 = vunpack.c.l.b16 %v26
    %v35 = vpack.c.b16 %v34, %v33
    %v40 = vunpack.c.l.b16 %v27
    %v41 = vunpack.c.l.b16 %v28
    %v42 = vunpack.c.l.b16 %v29
    %v43 = vunpack.c.l.b16 %v30
    %v44 = vpack.c.b16 %v41, %v40
    %v45 = vpack.c.b16 %v43, %v42
    %vm48 = vcmask 261120
    %v50 = vsel %vm48, %v35, 0
    %52 = vmatprep.subr.bf16.mxu0 0
    %53 = vmatpush1.bf16.msra.mxu0 %v44
    %54 = vmatprep.subr.bf16.mxu0 0
    %55 = vmatpush1.bf16.msra.mxu0 %v45
    %56 = vmatprep.subr.bf16.mxu0 0
    %57 = vmatpush1.bf16.msra.mxu0 0
    %58 = vmatprep.subr.bf16.mxu0 0
    %59 = vmatpush1.bf16.msra.mxu0 0
    %60 = vmatprep.subr.bf16.mxu0 0
    %61 = vmatpush1.bf16.msra.mxu0 0
    %62 = vmatprep.subr.bf16.mxu0 0
    %63 = vmatpush1.bf16.msra.mxu0 0
    %64 = vmatprep.subr.bf16.mxu0 0
    %65 = vmatpush1.bf16.msra.mxu0 0
    %66 = vmatprep.subr.bf16.mxu0 0
    %67 = vmatpush1.bf16.msra.mxu0 0
    %68 = vmatprep.subr.bf16.mxu0 0
    %69 = vmatpush1.bf16.msra.mxu0 0
    %70 = vmatprep.subr.bf16.mxu0 0
    %71 = vmatpush1.bf16.msra.mxu0 0
    %72 = vmatprep.subr.bf16.mxu0 0
    %73 = vmatpush1.bf16.msra.mxu0 0
    %74 = vmatprep.subr.bf16.mxu0 0
    %75 = vmatpush1.bf16.msra.mxu0 0
    %76 = vmatprep.subr.bf16.mxu0 0
    %77 = vmatpush1.bf16.msra.mxu0 0
    %78 = vmatprep.subr.bf16.mxu0 0
    %79 = vmatpush1.bf16.msra.mxu0 0
    %80 = vmatprep.subr.bf16.mxu0 0
    %81 = vmatpush1.bf16.msra.mxu0 0
    %82 = vmatprep.subr.bf16.mxu0 0
    %83 = vmatpush1.bf16.msra.mxu0 0
    %84 = vmatprep.mubr.bf16.mxu0 0
    %85 = vmatmul.mubr.bf16.gmra.mrb[0].mxu0 %v50
    %v86 = vpop.f32.mrb[0].mxu0
    %v87 = vadd.f32 0.0, %v86
    %v88 = vpop.f32.mrb[0].mxu0
    %v89 = vpop.f32.mrb[0].mxu0
    %v90 = vadd.f32 0.0, %v89
    %v91 = vpop.f32.mrb[0].mxu0
    %92 = vdwg.mxu0
    %v93 = vadd.f32 %v23, %v87
    %v94 = vadd.f32 %v24, %v90
    %95 = vst.msk [vmem:[#allocation2] sm:$0xff] %vm48, %v93
    %96 = vst.msk [vmem:[#allocation2 + $0x8] sm:$0xff] %vm48, %v94
    // Predicated region
    $region18: #{attention_forward.5} parent=1 // pred_check
      %p97 = pneg %p16
    $region19: #{attention_forward.5} parent=1 // pred_check_branch
      %99 = sbr.rel (%p97) target = $region21
    $region20: #{attention_forward.5} parent=1 // pred_region
      %v100 = vld [vmem:[#allocation2] sm:$0xff]
      %v101 = vld [vmem:[#allocation2 + $0x8] sm:$0xff]
      %v102 = vld [vmem:[%s2] sm:$0x1]
      %v104 = vlaneseq
      %v105 = vshrl.u32 %v104, 7
      %v106 = vsub.s32 0, %v105
      %v107 = vrot.slane %v102, %v106
      %v109 = vadd.f32 %v100, %v107
      %v110 = vadd.f32 %v101, %v107
      %111 = vst.msk [vmem:[#allocation3] sm:$0xff] %vm48, %v109
      %112 = vst.msk [vmem:[#allocation3 + $0x8] sm:$0xff] %vm48, %v110
    $region21: #{attention_forward.5} parent=1 // pred_fallthru
      _
    // Predicated region
    $region22: #{attention_forward.5} parent=1 // pred_check
      _
    $region23: #{attention_forward.5} parent=1 // pred_check_branch
      %114 = sbr.rel (0) target = $region25
    $region24: #{attention_forward.5} parent=1 // pred_region
      %s116 = ssub.s32 256, 256
      %117 = vsyncadd [#allocation4], %s116
      %s118 = sshll.u32 [#allocation3], 4
      %s119 = int_to_ptr.vmem [resolvable:$true] %s118
      %124 = dma.vmem_to_hbm [thread:$0]  %s119, 256, %s3, [#allocation4], 128, 128, 8
    $region25: #{attention_forward.5} parent=1 // pred_fallthru
      _
    // Predicated region
    $region26: #{attention_forward.5} parent=1 // pred_check
      _
    $region27: #{attention_forward.5} parent=1 // pred_check_branch
      %126 = sbr.rel (0) target = $region29
    $region28: #{attention_forward.5} parent=1 // pred_region
      %127 = dma.done [#allocation4], 256
    $region29: #{attention_forward.5} parent=1 // pred_fallthru
      _
    %128 = vsyncpa [#allocation4], 1

// kernel: attention_forward.3
$region0: #{attention_forward.3}
  #allocation0 [shape = 'u32[]', space=smem, size = 0x4, offset = 0x4, fixed_abs, tag = 'smem constant byte address 0x4 - core index']
  #allocation1 [shape = 'u32[144,128]{1,0:T(1,128)}', space=vmem, size = 0x12000, scoped, tag = 'internal scratch']
  #allocation2 [shape = 'f32[16,96]{1,0:T(8,128)}', space=vmem, size = 0x2000, scoped, tag = 'scratch operand']
  %s0 = inlined_call_operand.vmem [shape: f32[16,32], index: 0, kind: input, shape index: {}]
  %s1 = inlined_call_operand.vmem [shape: bf16[32,96], index: 1, kind: input, shape index: {}]
  %s2 = inlined_call_operand.vmem [shape: f32[1,96], index: 2, kind: input, shape index: {}]
  %s3 = inlined_call_operand.vmem [shape: bf16[16,96], index: 3, kind: output, shape index: {}]
  %s4 = sld [smem:[#allocation0]]
  $region30: #{attention_forward.3} parent=0
    _
  %s6 = ssub.s32 1, %s4
  %s7 = scalar_select 0, %s6, %s4
  // Predicated region
  $region2: #{attention_forward.3} parent=0 // pred_check
    _
  $region3: #{attention_forward.3} parent=0 // pred_check_branch
    %9 = sbr.rel (0) target = $region5
  $region4: #{attention_forward.3} parent=0 // pred_region
    _
  $region5: #{attention_forward.3} parent=0 // pred_fallthru
    _
  // Predicated region
  $region6: #{attention_forward.3} parent=0 // pred_check
    _
  $region7: #{attention_forward.3} parent=0 // pred_check_branch
    %11 = sbr.rel (0) target = $region9
  $region8: #{attention_forward.3} parent=0 // pred_region
    _
  $region9: #{attention_forward.3} parent=0 // pred_fallthru
    _
  // Predicated region
  $region10: #{attention_forward.3} parent=0 // pred_check
    _
  $region11: #{attention_forward.3} parent=0 // pred_check_branch
    %13 = sbr.rel (0) target = $region13
  $region12: #{attention_forward.3} parent=0 // pred_region
    _
  $region13: #{attention_forward.3} parent=0 // pred_fallthru
    _
  %p15 = scmp.eq.s32.totalorder 0, 0
  // Predicated region
  $region14: #{attention_forward.3} parent=0 // pred_check
    %p16 = pneg %p15
  $region15: #{attention_forward.3} parent=0 // pred_check_branch
    %18 = sbr.rel (%p16) target = $region17
  $region16: #{attention_forward.3} parent=0 // pred_region
    %vm19 = vcmask 785408
    %20 = vst.msk [vmem:[#allocation2] sm:$0xff] %vm19, 0.0
    %21 = vst.msk [vmem:[#allocation2 + $0x8] sm:$0xff] %vm19, 0.0
  $region17: #{attention_forward.3} parent=0 // pred_fallthru
    _
  %v22 = vld [vmem:[#allocation2] sm:$0xff]
  %v23 = vld [vmem:[#allocation2 + $0x8] sm:$0xff]
  %v24 = vld [vmem:[%s0] sm:$0xff]
  %v25 = vld [vmem:[%s0 + $0x8] sm:$0xff]
  %v26 = vpack.c.bf16 %v25, %v24
  %v27 = vld [vmem:[%s1] sm:$0xf]
  %v28 = vld [vmem:[%s1 + $0x4] sm:$0xf]
  %v29 = vld [vmem:[%s1 + $0x8] sm:$0xf]
  %v30 = vld [vmem:[%s1 + $0xc] sm:$0xf]
  %v35 = vunpack.c.l.b16 %v27
  %v36 = vunpack.c.l.b16 %v28
  %v37 = vunpack.c.l.b16 %v29
  %v38 = vunpack.c.l.b16 %v30
  %v39 = vpack.c.b16 %v36, %v35
  %v40 = vpack.c.b16 %v38, %v37
  %vm43 = vcmask 261120
  %v45 = vsel %vm43, %v26, 0
  %47 = vmatprep.subr.bf16.mxu0 0
  %48 = vmatpush1.bf16.msra.mxu0 %v39
  %49 = vmatprep.subr.bf16.mxu0 0
  %50 = vmatpush1.bf16.msra.mxu0 %v40
  %51 = vmatprep.subr.bf16.mxu0 0
  %52 = vmatpush1.bf16.msra.mxu0 0
  %53 = vmatprep.subr.bf16.mxu0 0
  %54 = vmatpush1.bf16.msra.mxu0 0
  %55 = vmatprep.subr.bf16.mxu0 0
  %56 = vmatpush1.bf16.msra.mxu0 0
  %57 = vmatprep.subr.bf16.mxu0 0
  %58 = vmatpush1.bf16.msra.mxu0 0
  %59 = vmatprep.subr.bf16.mxu0 0
  %60 = vmatpush1.bf16.msra.mxu0 0
  %61 = vmatprep.subr.bf16.mxu0 0
  %62 = vmatpush1.bf16.msra.mxu0 0
  %63 = vmatprep.subr.bf16.mxu0 0
  %64 = vmatpush1.bf16.msra.mxu0 0
  %65 = vmatprep.subr.bf16.mxu0 0
  %66 = vmatpush1.bf16.msra.mxu0 0
  %67 = vmatprep.subr.bf16.mxu0 0
  %68 = vmatpush1.bf16.msra.mxu0 0
  %69 = vmatprep.subr.bf16.mxu0 0
  %70 = vmatpush1.bf16.msra.mxu0 0
  %71 = vmatprep.subr.bf16.mxu0 0
  %72 = vmatpush1.bf16.msra.mxu0 0
  %73 = vmatprep.subr.bf16.mxu0 0
  %74 = vmatpush1.bf16.msra.mxu0 0
  %75 = vmatprep.subr.bf16.mxu0 0
  %76 = vmatpush1.bf16.msra.mxu0 0
  %77 = vmatprep.subr.bf16.mxu0 0
  %78 = vmatpush1.bf16.msra.mxu0 0
  %79 = vmatprep.mubr.bf16.mxu0 0
  %80 = vmatmul.mubr.bf16.gmra.mrb[0].mxu0 %v45
  %v81 = vpop.f32.mrb[0].mxu0
  %v82 = vadd.f32 0.0, %v81
  %v83 = vpop.f32.mrb[0].mxu0
  %v84 = vpop.f32.mrb[0].mxu0
  %v85 = vadd.f32 0.0, %v84
  %v86 = vpop.f32.mrb[0].mxu0
  %87 = vdwg.mxu0
  %v88 = vadd.f32 %v22, %v82
  %v89 = vadd.f32 %v23, %v85
  %vm90 = vcmask 785408
  %91 = vst.msk [vmem:[#allocation2] sm:$0xff] %vm90, %v88
  %92 = vst.msk [vmem:[#allocation2 + $0x8] sm:$0xff] %vm90, %v89
  // Predicated region
  $region18: #{attention_forward.3} parent=0 // pred_check
    %p93 = pneg %p15
  $region19: #{attention_forward.3} parent=0 // pred_check_branch
    %95 = sbr.rel (%p93) target = $region21
  $region20: #{attention_forward.3} parent=0 // pred_region
    %v96 = vld [vmem:[#allocation2] sm:$0xff]
    %v97 = vld [vmem:[#allocation2 + $0x8] sm:$0xff]
    %v98 = vld [vmem:[%s2] sm:$0x1]
    %v100 = vlaneseq
    %v101 = vshrl.u32 %v100, 7
    %v102 = vsub.s32 0, %v101
    %v103 = vrot.slane %v98, %v102
    %v105 = vadd.f32 %v96, %v103
    %v106 = vadd.f32 %v97, %v103
    %v107 = vpack.c.bf16 %v106, %v105
    %v109 = vunpack.c.l.b16 %v107
    %v110 = vunpack.c.h.b16 %v107
    %v111 = vpack.c.b16 %v109, %v109
    %v112 = vpack.c.b16 %v110, %v110
    %vm115 = vcmask 781312
    %116 = vst.msk [vmem:[%s3] sm:$0xf] %vm115, %v111
    %117 = vst.msk [vmem:[%s3 + $0x4] sm:$0xf] %vm115, %v112
  $region21: #{attention_forward.3} parent=0 // pred_fallthru
    _
  // Predicated region
  $region22: #{attention_forward.3} parent=0 // pred_check
    _
  $region23: #{attention_forward.3} parent=0 // pred_check_branch
    %119 = sbr.rel (0) target = $region25
  $region24: #{attention_forward.3} parent=0 // pred_region
    _
  $region25: #{attention_forward.3} parent=0 // pred_fallthru
    _
  // Predicated region
  $region26: #{attention_forward.3} parent=0 // pred_check
    _
  $region27: #{attention_forward.3} parent=0 // pred_check_branch
    %121 = sbr.rel (0) target = $region29
  $region28: #{attention_forward.3} parent=0 // pred_region
    _
  $region29: #{attention_forward.3} parent=0 // pred_fallthru
    _

// kernel: attention_forward.4
$region0: #{attention_forward.4}
  #allocation0 [shape = 'u32[]', space=smem, size = 0x4, offset = 0x4, fixed_abs, tag = 'smem constant byte address 0x4 - core index']
  #allocation1 [shape = 'u32[144,128]{1,0:T(1,128)}', space=vmem, size = 0x12000, scoped, tag = 'internal scratch']
  %s0 = inlined_call_operand.vmem [shape: bf16[2,8,3,4,8], index: 0, kind: input, shape index: {}, may-alias: {0,1,2}]
  %s1 = inlined_call_operand.vmem [shape: bf16[2,8,3,4,8], index: 1, kind: input, shape index: {}, may-alias: {0,1,2}]
  %s2 = inlined_call_operand.vmem [shape: bf16[2,8,3,4,8], index: 2, kind: input, shape index: {}, may-alias: {0,1,2}]
  %s3 = inlined_call_operand.hbm [shape: f32[2,4,8,8], index: 3, kind: output, shape index: {0}]
  %s4 = inlined_call_operand.vmem [shape: bf16[2,8,32], index: 4, kind: output, shape index: {1}]
  %5 = xla_tuple %s3, %s4
  %s6 = sld [smem:[#allocation0]]
  $region176: #{attention_forward.4} parent=0
    _
  %s8 = ssub.s32 1, %s6
  %s9 = scalar_select 0, %s8, %s6
  $region1: #{attention_forward.4} parent=0
    #allocation2 [shape = 'u8[16384]{0}', space=vmem, size = 0x4000, scoped, tag = 'input window, operand 0']
    #allocation3 [shape = 'u8[16384]{0}', space=vmem, size = 0x4000, scoped, tag = 'input window, operand 1']
    #allocation4 [shape = 'u8[16384]{0}', space=vmem, size = 0x4000, scoped, tag = 'input window, operand 2']
    #allocation5 [shape = 'u8[32768]{0}', space=vmem, size = 0x8000, scoped, tag = 'output window, operand 0']
    #allocation6 [shape = 's32[2]{0}', space=sflag, size = 0x8, scoped, tag = 'scoped memory for attention_forward.4']
    %10 = vsyncpa [#allocation6], 0
    %s11 = scalar_lea.sflag [#allocation6], 1
    %12 = vsyncpa %s11, 0
    loop: start=0, step=1, limit=4
    $region2: #{attention_forward.4} parent=1 // loop_pre_header
      _
    $region3: #{attention_forward.4} parent=1 // loop_header
      %s14 = sphi 0, %s18
      %p15 = scmp.ge.s32.totalorder %s14, 4
      %s21 = sphi 0, %s33
      %s22 = sphi 0, %s29
      %s23 = sphi 0, %s21
      %s24 = sphi 0, %s22
      %s25 = sphi 0, %s23
      %s26 = sphi 0, %s24
      %s38 = sphi 0, %s40
      %s41 = sphi 0, %s38
      %s42 = sphi 0, %s41
      %s58 = sphi 0, %s42
      %s64 = sphi 0, %s66
      %s67 = sphi 0, %s64
      %s68 = sphi 0, %s67
      %s84 = sphi 0, %s68
      %s90 = sphi 0, %s92
      %s93 = sphi 0, %s90
      %s94 = sphi 0, %s93
      %s110 = sphi 0, %s94
      %s118 = sphi 0, %s120
      %s121 = sphi 0, %s118
      %s122 = sphi 0, %s121
      %s138 = sphi 0, %s122
      %s146 = sphi 0, %s148
      %s149 = sphi 0, %s146
      %s150 = sphi 0, %s149
      %s166 = sphi 0, %s150
    $region4: #{attention_forward.4} parent=1 // loop_header_branch
      %17 = sbr.rel (%p15) target = $region8
    $region5: #{attention_forward.4} parent=1 // loop_body
      %s19 = ssub.s32 %s14, 1
      %s20 = ssub.s32 %s14, 2
      %s27 = sadd.s32 1, %s22
      %p28 = scmp.ge.s32.totalorder %s27, 1
      %s29 = scalar_select %p28, 0, %s27
      %s30 = sadd.s32 1, %s21
      %s31 = scalar_select %p28, %s30, %s21
      %p32 = scmp.ge.s32.totalorder %s31, 2
      %s33 = scalar_select %p32, 0, %s31
      %s34 = ssub.s32 %s21, %s33
      %s35 = ssub.s32 %s22, %s29
      %s36 = sor.u32 %s34, %s35
      %p37 = scmp.eq.s32.totalorder %s36, 0
      %s39 = sadd.s32 %s38, 1
      %s40 = scalar_select %p37, %s38, %s39
      %p43 = pneg %p37
      %p44 = scmp.eq.s32.totalorder %s14, 1
      %p45 = por %p43, %p44
      %p46 = scmp.ne.s32.totalorder %s38, %s41
      %p47 = scmp.eq.s32.totalorder %s14, 0
      %p48 = por %p46, %p47
      %p49 = scmp.ne.s32.totalorder %s38, %s41
      %p50 = scmp.eq.s32.totalorder %s19, 1
      %p51 = por %p49, %p50
      %p52 = scmp.ne.s32.totalorder %s41, %s42
      %p53 = scmp.eq.s32.totalorder %s19, 0
      %p54 = por %p52, %p53
      %p55 = scmp.ne.s32.totalorder %s41, %s42
      %p56 = scmp.eq.s32.totalorder %s20, 1
      %p57 = por %p55, %p56
      %p59 = scmp.ne.s32.totalorder %s42, %s58
      %p60 = scmp.eq.s32.totalorder %s20, 0
      %p61 = por %p59, %p60
      %s62 = ssub.s32 %s21, %s33
      %p63 = scmp.eq.s32.totalorder %s62, 0
      %s65 = sadd.s32 %s64, 1
      %s66 = scalar_select %p63, %s64, %s65
      %p69 = pneg %p63
      %p70 = scmp.eq.s32.totalorder %s14, 1
      %p71 = por %p69, %p70
      %p72 = scmp.ne.s32.totalorder %s64, %s67
      %p73 = scmp.eq.s32.totalorder %s14, 0
      %p74 = por %p72, %p73
      %p75 = scmp.ne.s32.totalorder %s64, %s67
      %p76 = scmp.eq.s32.totalorder %s19, 1
      %p77 = por %p75, %p76
      %p78 = scmp.ne.s32.totalorder %s67, %s68
      %p79 = scmp.eq.s32.totalorder %s19, 0
      %p80 = por %p78, %p79
      %p81 = scmp.ne.s32.totalorder %s67, %s68
      %p82 = scmp.eq.s32.totalorder %s20, 1
      %p83 = por %p81, %p82
      %p85 = scmp.ne.s32.totalorder %s68, %s84
      %p86 = scmp.eq.s32.totalorder %s20, 0
      %p87 = por %p85, %p86
      %s88 = ssub.s32 %s21, %s33
      %p89 = scmp.eq.s32.totalorder %s88, 0
      %s91 = sadd.s32 %s90, 1
      %s92 = scalar_select %p89, %s90, %s91
      %p95 = pneg %p89
      %p96 = scmp.eq.s32.totalorder %s14, 1
      %p97 = por %p95, %p96
      %p98 = scmp.ne.s32.totalorder %s90, %s93
      %p99 = scmp.eq.s32.totalorder %s14, 0
      %p100 = por %p98, %p99
      %p101 = scmp.ne.s32.totalorder %s90, %s93
      %p102 = scmp.eq.s32.totalorder %s19, 1
      %p103 = por %p101, %p102
      %p104 = scmp.ne.s32.totalorder %s93, %s94
      %p105 = scmp.eq.s32.totalorder %s19, 0
      %p106 = por %p104, %p105
      %p107 = scmp.ne.s32.totalorder %s93, %s94
      %p108 = scmp.eq.s32.totalorder %s20, 1
      %p109 = por %p107, %p108
      %p111 = scmp.ne.s32.totalorder %s94, %s110
      %p112 = scmp.eq.s32.totalorder %s20, 0
      %p113 = por %p111, %p112
      %s114 = ssub.s32 %s21, %s33
      %s115 = ssub.s32 %s22, %s29
      %s116 = sor.u32 %s114, %s115
      %p117 = scmp.eq.s32.totalorder %s116, 0
      %s119 = sadd.s32 %s118, 1
      %s120 = scalar_select %p117, %s118, %s119
      %p123 = pneg %p117
      %p124 = scmp.eq.s32.totalorder %s14, 1
      %p125 = por %p123, %p124
      %p126 = scmp.ne.s32.totalorder %s118, %s121
      %p127 = scmp.eq.s32.totalorder %s14, 0
      %p128 = por %p126, %p127
      %p129 = scmp.ne.s32.totalorder %s118, %s121
      %p130 = scmp.eq.s32.totalorder %s19, 1
      %p131 = por %p129, %p130
      %p132 = scmp.ne.s32.totalorder %s121, %s122
      %p133 = scmp.eq.s32.totalorder %s19, 0
      %p134 = por %p132, %p133
      %p135 = scmp.ne.s32.totalorder %s121, %s122
      %p136 = scmp.eq.s32.totalorder %s20, 1
      %p137 = por %p135, %p136
      %p139 = scmp.ne.s32.totalorder %s122, %s138
      %p140 = scmp.eq.s32.totalorder %s20, 0
      %p141 = por %p139, %p140
      %s142 = ssub.s32 %s21, %s33
      %s143 = ssub.s32 %s22, %s29
      %s144 = sor.u32 %s142, %s143
      %p145 = scmp.eq.s32.totalorder %s144, 0
      %s147 = sadd.s32 %s146, 1
      %s148 = scalar_select %p145, %s146, %s147
      %p151 = pneg %p145
      %p152 = scmp.eq.s32.totalorder %s14, 1
      %p153 = por %p151, %p152
      %p154 = scmp.ne.s32.totalorder %s146, %s149
      %p155 = scmp.eq.s32.totalorder %s14, 0
      %p156 = por %p154, %p155
      %p157 = scmp.ne.s32.totalorder %s146, %s149
      %p158 = scmp.eq.s32.totalorder %s19, 1
      %p159 = por %p157, %p158
      %p160 = scmp.ne.s32.totalorder %s149, %s150
      %p161 = scmp.eq.s32.totalorder %s19, 0
      %p162 = por %p160, %p161
      %p163 = scmp.ne.s32.totalorder %s149, %s150
      %p164 = scmp.eq.s32.totalorder %s20, 1
      %p165 = por %p163, %p164
      %p167 = scmp.ne.s32.totalorder %s150, %s166
      %p168 = scmp.eq.s32.totalorder %s20, 0
      %p169 = por %p167, %p168
      %p170 = scmp.le.s32.totalorder 1, %s14
      %p171 = scmp.lt.s32.totalorder %s14, 3
      %p172 = pnand %p170, %p171
      %p173 = pneg %p172
      // Predicated region
      $region9: #{attention_forward.4} parent=5 // pred_check
        _
      $region10: #{attention_forward.4} parent=5 // pred_check_branch
        %175 = sbr.rel (%p172) target = $region12
      $region11: #{attention_forward.4} parent=5 // pred_region
        %s176 = ssub.s32 %s14, 1
      $region12: #{attention_forward.4} parent=5 // pred_fallthru
        _
      %p177 = scmp.lt.s32.totalorder %s14, 2
      // Predicated region
      $region13: #{attention_forward.4} parent=5 // pred_check
        %p178 = pneg %p177
      $region14: #{attention_forward.4} parent=5 // pred_check_branch
        %180 = sbr.rel (%p178) target = $region16
      $region15: #{attention_forward.4} parent=5 // pred_region
        // Predicated region
        $region17: #{attention_forward.4} parent=15 // pred_check
          %p181 = pneg %p48
        $region18: #{attention_forward.4} parent=15 // pred_check_branch
          %183 = sbr.rel (%p181) target = $region20
        $region19: #{attention_forward.4} parent=15 // pred_region
          %s184 = sand.u32 %s38, 1
          %s185 = sand.u32 %s38, 1
          %s186 = smul.addr %s185, 16
          %s187 = scalar_lea.vmem [#allocation2], %s186
          %s188 = smul.u32 8, %s22
          %s189 = smul.addr %s188, 3
          %s190 = smul.addr %s21, 24
          %s191 = sadd.s32 %s189, %s190
          %s192 = smul.addr %s191, 2
          %s193 = scalar_lea.vmem %s0, %s192
          // Predicated region
          $region21: #{attention_forward.4} parent=19 // pred_check
            _
          $region22: #{attention_forward.4} parent=19 // pred_check_branch
            %195 = sbr.rel (0) target = $region24
          $region23: #{attention_forward.4} parent=19 // pred_region
            // Predicated region
            $region25: #{attention_forward.4} parent=23 // pred_check
              _
            $region26: #{attention_forward.4} parent=23 // pred_check_branch
              %197 = sbr.rel target = $region28
            $region27: #{attention_forward.4} parent=23 // pred_region
              // Predicated region
              $region40: #{attention_forward.4} parent=27 // pred_check
                _
              $region41: #{attention_forward.4} parent=27 // pred_check_branch
                %226 = sbr.rel (0) target = $region43
              $region42: #{attention_forward.4} parent=27 // pred_region
                loop: start=0, step=1, limit=1
                $region44: #{attention_forward.4} parent=42 // loop_pre_header
                  _
                $region45: #{attention_forward.4} parent=42 // loop_header
                  %s228 = sphi 0, %s232
                  %p229 = scmp.ge.s32.totalorder %s228, 1
                  %s233 = sphi %s193, %s193
                  %s234 = sphi %s187, %s187
                $region46: #{attention_forward.4} parent=42 // loop_header_branch
                  %231 = sbr.rel (%p229) target = $region50
                $region47: #{attention_forward.4} parent=42 // loop_body
                  _
                $region48: #{attention_forward.4} parent=42 // loop_footer
                  %s232 = sadd.s32 1, %s228
                $region49: #{attention_forward.4} parent=42 // loop_footer_branch
                  %227 = sbr.rel target = $region45
                $region50: #{attention_forward.4} parent=42 // loop_exit
                  _
                loop: start=0, step=1, limit=1
                $region51: #{attention_forward.4} parent=42 // loop_pre_header
                  _
                $region52: #{attention_forward.4} parent=42 // loop_header
                  %s237 = sphi 0, %s241
                  %p238 = scmp.ge.s32.totalorder %s237, 1
                  %s242 = sphi %s193, %s193
                  %s243 = sphi %s187, %s187
                $region53: #{attention_forward.4} parent=42 // loop_header_branch
                  %240 = sbr.rel (%p238) target = $region57
                $region54: #{attention_forward.4} parent=42 // loop_body
                  %v244 = vld [vmem:[%s242] sm:$0x3]
                  %245 = vst [vmem:[%s243] sm:$0x3] %v244
                  %v246 = vld [vmem:[%s242 + $0x6] sm:$0x3]
                  %247 = vst [vmem:[%s243 + $0x2] sm:$0x3] %v246
                  %v248 = vld [vmem:[%s242 + $0xc] sm:$0x3]
                  %249 = vst [vmem:[%s243 + $0x4] sm:$0x3] %v248
                  %v250 = vld [vmem:[%s242 + $0x12] sm:$0x3]
                  %251 = vst [vmem:[%s243 + $0x6] sm:$0x3] %v250
                  %v252 = vld [vmem:[%s242 + $0x18] sm:$0x3]
                  %253 = vst [vmem:[%s243 + $0x8] sm:$0x3] %v252
                  %v254 = vld [vmem:[%s242 + $0x1e] sm:$0x3]
                  %255 = vst [vmem:[%s243 + $0xa] sm:$0x3] %v254
                  %v256 = vld [vmem:[%s242 + $0x24] sm:$0x3]
                  %257 = vst [vmem:[%s243 + $0xc] sm:$0x3] %v256
                  %v258 = vld [vmem:[%s242 + $0x2a] sm:$0x3]
                  %259 = vst [vmem:[%s243 + $0xe] sm:$0x3] %v258
                $region55: #{attention_forward.4} parent=42 // loop_footer
                  %s241 = sadd.s32 1, %s237
                $region56: #{attention_forward.4} parent=42 // loop_footer_branch
                  %236 = sbr.rel target = $region52
                $region57: #{attention_forward.4} parent=42 // loop_exit
                  _
              $region43: #{attention_forward.4} parent=27 // pred_fallthru
                _
            $region28: #{attention_forward.4} parent=23 // pred_fallthru
              _
            // Predicated region
            $region29: #{attention_forward.4} parent=23 // pred_check
              _
            $region30: #{attention_forward.4} parent=23 // pred_check_branch
              %199 = sbr.rel (0) target = $region32
            $region31: #{attention_forward.4} parent=23 // pred_region
              loop: start=0, step=1, limit=1
              $region33: #{attention_forward.4} parent=31 // loop_pre_header
                _
              $region34: #{attention_forward.4} parent=31 // loop_header
                %s202 = sphi 0, %s206
                %p203 = scmp.ge.s32.totalorder %s202, 1
                %s207 = sphi %s193, %s193
                %s208 = sphi %s187, %s187
              $region35: #{attention_forward.4} parent=31 // loop_header_branch
                %205 = sbr.rel (%p203) target = $region39
              $region36: #{attention_forward.4} parent=31 // loop_body
                %v209 = vld [vmem:[%s207] sm:$0x3]
                %210 = vst [vmem:[%s208] sm:$0x3] %v209
                %v211 = vld [vmem:[%s207 + $0x6] sm:$0x3]
                %212 = vst [vmem:[%s208 + $0x2] sm:$0x3] %v211
                %v213 = vld [vmem:[%s207 + $0xc] sm:$0x3]
                %214 = vst [vmem:[%s208 + $0x4] sm:$0x3] %v213
                %v215 = vld [vmem:[%s207 + $0x12] sm:$0x3]
                %216 = vst [vmem:[%s208 + $0x6] sm:$0x3] %v215
                %v217 = vld [vmem:[%s207 + $0x18] sm:$0x3]
                %218 = vst [vmem:[%s208 + $0x8] sm:$0x3] %v217
                %v219 = vld [vmem:[%s207 + $0x1e] sm:$0x3]
                %220 = vst [vmem:[%s208 + $0xa] sm:$0x3] %v219
                %v221 = vld [vmem:[%s207 + $0x24] sm:$0x3]
                %222 = vst [vmem:[%s208 + $0xc] sm:$0x3] %v221
                %v223 = vld [vmem:[%s207 + $0x2a] sm:$0x3]
                %224 = vst [vmem:[%s208 + $0xe] sm:$0x3] %v223
              $region37: #{attention_forward.4} parent=31 // loop_footer
                %s206 = sadd.s32 1, %s202
              $region38: #{attention_forward.4} parent=31 // loop_footer_branch
                %201 = sbr.rel target = $region34
              $region39: #{attention_forward.4} parent=31 // loop_exit
                _
            $region32: #{attention_forward.4} parent=23 // pred_fallthru
              _
          $region24: #{attention_forward.4} parent=19 // pred_fallthru
            _
          %260 = vnop
        $region20: #{attention_forward.4} parent=15 // pred_fallthru
          _
        // Predicated region
        $region58: #{attention_forward.4} parent=15 // pred_check
          %p261 = pneg %p74
        $region59: #{attention_forward.4} parent=15 // pred_check_branch
          %263 = sbr.rel (%p261) target = $region61
        $region60: #{attention_forward.4} parent=15 // pred_region
          %s264 = sand.u32 %s64, 1
          %s265 = sand.u32 %s64, 1
          %s266 = smul.addr %s265, 16
          %s267 = scalar_lea.vmem [#allocation3], %s266
          %s268 = smul.addr %s21, 24
          %s269 = sadd.s32 1, %s268
          %s270 = smul.addr %s269, 2
          %s271 = scalar_lea.vmem %s1, %s270
          // Predicated region
          $region62: #{attention_forward.4} parent=60 // pred_check
            _
          $region63: #{attention_forward.4} parent=60 // pred_check_branch
            %273 = sbr.rel (0) target = $region65
          $region64: #{attention_forward.4} parent=60 // pred_region
            // Predicated region
            $region66: #{attention_forward.4} parent=64 // pred_check
              _
            $region67: #{attention_forward.4} parent=64 // pred_check_branch
              %275 = sbr.rel target = $region69
            $region68: #{attention_forward.4} parent=64 // pred_region
              // Predicated region
              $region81: #{attention_forward.4} parent=68 // pred_check
                _
              $region82: #{attention_forward.4} parent=68 // pred_check_branch
                %304 = sbr.rel (0) target = $region84
              $region83: #{attention_forward.4} parent=68 // pred_region
                loop: start=0, step=1, limit=1
                $region85: #{attention_forward.4} parent=83 // loop_pre_header
                  _
                $region86: #{attention_forward.4} parent=83 // loop_header
                  %s306 = sphi 0, %s310
                  %p307 = scmp.ge.s32.totalorder %s306, 1
                  %s311 = sphi %s271, %s271
                  %s312 = sphi %s267, %s267
                $region87: #{attention_forward.4} parent=83 // loop_header_branch
                  %309 = sbr.rel (%p307) target = $region91
                $region88: #{attention_forward.4} parent=83 // loop_body
                  _
                $region89: #{attention_forward.4} parent=83 // loop_footer
                  %s310 = sadd.s32 1, %s306
                $region90: #{attention_forward.4} parent=83 // loop_footer_branch
                  %305 = sbr.rel target = $region86
                $region91: #{attention_forward.4} parent=83 // loop_exit
                  _
                loop: start=0, step=1, limit=1
                $region92: #{attention_forward.4} parent=83 // loop_pre_header
                  _
                $region93: #{attention_forward.4} parent=83 // loop_header
                  %s315 = sphi 0, %s319
                  %p316 = scmp.ge.s32.totalorder %s315, 1
                  %s320 = sphi %s271, %s271
                  %s321 = sphi %s267, %s267
                $region94: #{attention_forward.4} parent=83 // loop_header_branch
                  %318 = sbr.rel (%p316) target = $region98
                $region95: #{attention_forward.4} parent=83 // loop_body
                  %v322 = vld [vmem:[%s320] sm:$0x3]
                  %323 = vst [vmem:[%s321] sm:$0x3] %v322
                  %v324 = vld [vmem:[%s320 + $0x6] sm:$0x3]
                  %325 = vst [vmem:[%s321 + $0x2] sm:$0x3] %v324
                  %v326 = vld [vmem:[%s320 + $0xc] sm:$0x3]
                  %327 = vst [vmem:[%s321 + $0x4] sm:$0x3] %v326
                  %v328 = vld [vmem:[%s320 + $0x12] sm:$0x3]
                  %329 = vst [vmem:[%s321 + $0x6] sm:$0x3] %v328
                  %v330 = vld [vmem:[%s320 + $0x18] sm:$0x3]
                  %331 = vst [vmem:[%s321 + $0x8] sm:$0x3] %v330
                  %v332 = vld [vmem:[%s320 + $0x1e] sm:$0x3]
                  %333 = vst [vmem:[%s321 + $0xa] sm:$0x3] %v332
                  %v334 = vld [vmem:[%s320 + $0x24] sm:$0x3]
                  %335 = vst [vmem:[%s321 + $0xc] sm:$0x3] %v334
                  %v336 = vld [vmem:[%s320 + $0x2a] sm:$0x3]
                  %337 = vst [vmem:[%s321 + $0xe] sm:$0x3] %v336
                $region96: #{attention_forward.4} parent=83 // loop_footer
                  %s319 = sadd.s32 1, %s315
                $region97: #{attention_forward.4} parent=83 // loop_footer_branch
                  %314 = sbr.rel target = $region93
                $region98: #{attention_forward.4} parent=83 // loop_exit
                  _
              $region84: #{attention_forward.4} parent=68 // pred_fallthru
                _
            $region69: #{attention_forward.4} parent=64 // pred_fallthru
              _
            // Predicated region
            $region70: #{attention_forward.4} parent=64 // pred_check
              _
            $region71: #{attention_forward.4} parent=64 // pred_check_branch
              %277 = sbr.rel (0) target = $region73
            $region72: #{attention_forward.4} parent=64 // pred_region
              loop: start=0, step=1, limit=1
              $region74: #{attention_forward.4} parent=72 // loop_pre_header
                _
              $region75: #{attention_forward.4} parent=72 // loop_header
                %s280 = sphi 0, %s284
                %p281 = scmp.ge.s32.totalorder %s280, 1
                %s285 = sphi %s271, %s271
                %s286 = sphi %s267, %s267
              $region76: #{attention_forward.4} parent=72 // loop_header_branch
                %283 = sbr.rel (%p281) target = $region80
              $region77: #{attention_forward.4} parent=72 // loop_body
                %v287 = vld [vmem:[%s285] sm:$0x3]
                %288 = vst [vmem:[%s286] sm:$0x3] %v287
                %v289 = vld [vmem:[%s285 + $0x6] sm:$0x3]
                %290 = vst [vmem:[%s286 + $0x2] sm:$0x3] %v289
                %v291 = vld [vmem:[%s285 + $0xc] sm:$0x3]
                %292 = vst [vmem:[%s286 + $0x4] sm:$0x3] %v291
                %v293 = vld [vmem:[%s285 + $0x12] sm:$0x3]
                %294 = vst [vmem:[%s286 + $0x6] sm:$0x3] %v293
                %v295 = vld [vmem:[%s285 + $0x18] sm:$0x3]
                %296 = vst [vmem:[%s286 + $0x8] sm:$0x3] %v295
                %v297 = vld [vmem:[%s285 + $0x1e] sm:$0x3]
                %298 = vst [vmem:[%s286 + $0xa] sm:$0x3] %v297
                %v299 = vld [vmem:[%s285 + $0x24] sm:$0x3]
                %300 = vst [vmem:[%s286 + $0xc] sm:$0x3] %v299
                %v301 = vld [vmem:[%s285 + $0x2a] sm:$0x3]
                %302 = vst [vmem:[%s286 + $0xe] sm:$0x3] %v301
              $region78: #{attention_forward.4} parent=72 // loop_footer
                %s284 = sadd.s32 1, %s280
              $region79: #{attention_forward.4} parent=72 // loop_footer_branch
                %279 = sbr.rel target = $region75
              $region80: #{attention_forward.4} parent=72 // loop_exit
                _
            $region73: #{attention_forward.4} parent=64 // pred_fallthru
              _
          $region65: #{attention_forward.4} parent=60 // pred_fallthru
            _
          %338 = vnop
        $region61: #{attention_forward.4} parent=15 // pred_fallthru
          _
        // Predicated region
        $region99: #{attention_forward.4} parent=15 // pred_check
          %p339 = pneg %p100
        $region100: #{attention_forward.4} parent=15 // pred_check_branch
          %341 = sbr.rel (%p339) target = $region102
        $region101: #{attention_forward.4} parent=15 // pred_region
          %s342 = sand.u32 %s90, 1
          %s343 = sand.u32 %s90, 1
          %s344 = smul.addr %s343, 16
          %s345 = scalar_lea.vmem [#allocation4], %s344
          %s346 = smul.addr %s21, 24
          %s347 = sadd.s32 2, %s346
          %s348 = smul.addr %s347, 2
          %s349 = scalar_lea.vmem %s2, %s348
          // Predicated region
          $region103: #{attention_forward.4} parent=101 // pred_check
            _
          $region104: #{attention_forward.4} parent=101 // pred_check_branch
            %351 = sbr.rel (0) target = $region106
          $region105: #{attention_forward.4} parent=101 // pred_region
            // Predicated region
            $region107: #{attention_forward.4} parent=105 // pred_check
              _
            $region108: #{attention_forward.4} parent=105 // pred_check_branch
              %353 = sbr.rel target = $region110
            $region109: #{attention_forward.4} parent=105 // pred_region
              // Predicated region
              $region122: #{attention_forward.4} parent=109 // pred_check
                _
              $region123: #{attention_forward.4} parent=109 // pred_check_branch
                %382 = sbr.rel (0) target = $region125
              $region124: #{attention_forward.4} parent=109 // pred_region
                loop: start=0, step=1, limit=1
                $region126: #{attention_forward.4} parent=124 // loop_pre_header
                  _
                $region127: #{attention_forward.4} parent=124 // loop_header
                  %s384 = sphi 0, %s388
                  %p385 = scmp.ge.s32.totalorder %s384, 1
                  %s389 = sphi %s349, %s349
                  %s390 = sphi %s345, %s345
                $region128: #{attention_forward.4} parent=124 // loop_header_branch
                  %387 = sbr.rel (%p385) target = $region132
                $region129: #{attention_forward.4} parent=124 // loop_body
                  _
                $region130: #{attention_forward.4} parent=124 // loop_footer
                  %s388 = sadd.s32 1, %s384
                $region131: #{attention_forward.4} parent=124 // loop_footer_branch
                  %383 = sbr.rel target = $region127
                $region132: #{attention_forward.4} parent=124 // loop_exit
                  _
                loop: start=0, step=1, limit=1
                $region133: #{attention_forward.4} parent=124 // loop_pre_header
                  _
                $region134: #{attention_forward.4} parent=124 // loop_header
                  %s393 = sphi 0, %s397
                  %p394 = scmp.ge.s32.totalorder %s393, 1
                  %s398 = sphi %s349, %s349
                  %s399 = sphi %s345, %s345
                $region135: #{attention_forward.4} parent=124 // loop_header_branch
                  %396 = sbr.rel (%p394) target = $region139
                $region136: #{attention_forward.4} parent=124 // loop_body
                  %v400 = vld [vmem:[%s398] sm:$0x3]
                  %401 = vst [vmem:[%s399] sm:$0x3] %v400
                  %v402 = vld [vmem:[%s398 + $0x6] sm:$0x3]
                  %403 = vst [vmem:[%s399 + $0x2] sm:$0x3] %v402
                  %v404 = vld [vmem:[%s398 + $0xc] sm:$0x3]
                  %405 = vst [vmem:[%s399 + $0x4] sm:$0x3] %v404
                  %v406 = vld [vmem:[%s398 + $0x12] sm:$0x3]
                  %407 = vst [vmem:[%s399 + $0x6] sm:$0x3] %v406
                  %v408 = vld [vmem:[%s398 + $0x18] sm:$0x3]
                  %409 = vst [vmem:[%s399 + $0x8] sm:$0x3] %v408
                  %v410 = vld [vmem:[%s398 + $0x1e] sm:$0x3]
                  %411 = vst [vmem:[%s399 + $0xa] sm:$0x3] %v410
                  %v412 = vld [vmem:[%s398 + $0x24] sm:$0x3]
                  %413 = vst [vmem:[%s399 + $0xc] sm:$0x3] %v412
                  %v414 = vld [vmem:[%s398 + $0x2a] sm:$0x3]
                  %415 = vst [vmem:[%s399 + $0xe] sm:$0x3] %v414
                $region137: #{attention_forward.4} parent=124 // loop_footer
                  %s397 = sadd.s32 1, %s393
                $region138: #{attention_forward.4} parent=124 // loop_footer_branch
                  %392 = sbr.rel target = $region134
                $region139: #{attention_forward.4} parent=124 // loop_exit
                  _
              $region125: #{attention_forward.4} parent=109 // pred_fallthru
                _
            $region110: #{attention_forward.4} parent=105 // pred_fallthru
              _
            // Predicated region
            $region111: #{attention_forward.4} parent=105 // pred_check
              _
            $region112: #{attention_forward.4} parent=105 // pred_check_branch
              %355 = sbr.rel (0) target = $region114
            $region113: #{attention_forward.4} parent=105 // pred_region
              loop: start=0, step=1, limit=1
              $region115: #{attention_forward.4} parent=113 // loop_pre_header
                _
              $region116: #{attention_forward.4} parent=113 // loop_header
                %s358 = sphi 0, %s362
                %p359 = scmp.ge.s32.totalorder %s358, 1
                %s363 = sphi %s349, %s349
                %s364 = sphi %s345, %s345
              $region117: #{attention_forward.4} parent=113 // loop_header_branch
                %361 = sbr.rel (%p359) target = $region121
              $region118: #{attention_forward.4} parent=113 // loop_body
                %v365 = vld [vmem:[%s363] sm:$0x3]
                %366 = vst [vmem:[%s364] sm:$0x3] %v365
                %v367 = vld [vmem:[%s363 + $0x6] sm:$0x3]
                %368 = vst [vmem:[%s364 + $0x2] sm:$0x3] %v367
                %v369 = vld [vmem:[%s363 + $0xc] sm:$0x3]
                %370 = vst [vmem:[%s364 + $0x4] sm:$0x3] %v369
                %v371 = vld [vmem:[%s363 + $0x12] sm:$0x3]
                %372 = vst [vmem:[%s364 + $0x6] sm:$0x3] %v371
                %v373 = vld [vmem:[%s363 + $0x18] sm:$0x3]
                %374 = vst [vmem:[%s364 + $0x8] sm:$0x3] %v373
                %v375 = vld [vmem:[%s363 + $0x1e] sm:$0x3]
                %376 = vst [vmem:[%s364 + $0xa] sm:$0x3] %v375
                %v377 = vld [vmem:[%s363 + $0x24] sm:$0x3]
                %378 = vst [vmem:[%s364 + $0xc] sm:$0x3] %v377
                %v379 = vld [vmem:[%s363 + $0x2a] sm:$0x3]
                %380 = vst [vmem:[%s364 + $0xe] sm:$0x3] %v379
              $region119: #{attention_forward.4} parent=113 // loop_footer
                %s362 = sadd.s32 1, %s358
              $region120: #{attention_forward.4} parent=113 // loop_footer_branch
                %357 = sbr.rel target = $region116
              $region121: #{attention_forward.4} parent=113 // loop_exit
                _
            $region114: #{attention_forward.4} parent=105 // pred_fallthru
              _
          $region106: #{attention_forward.4} parent=101 // pred_fallthru
            _
          %416 = vnop
        $region102: #{attention_forward.4} parent=15 // pred_fallthru
          _
      $region16: #{attention_forward.4} parent=5 // pred_fallthru
        _
      %p417 = scmp.le.s32.totalorder 1, %s14
      %p418 = scmp.lt.s32.totalorder %s14, 3
      %p419 = pnand %p417, %p418
      %p420 = pneg %p419
      // Predicated region
      $region140: #{attention_forward.4} parent=5 // pred_check
        _
      $region141: #{attention_forward.4} parent=5 // pred_check_branch
        %422 = sbr.rel (%p419) target = $region143
      $region142: #{attention_forward.4} parent=5 // pred_region
        %s423 = ssub.s32 %s14, 1
        %s424 = sand.u32 %s41, 1
        %s425 = sand.u32 %s41, 1
        %s426 = smul.addr %s425, 16
        %s427 = scalar_lea.vmem [#allocation2], %s426
        // Predicated region
        $region144: #{attention_forward.4} parent=142 // pred_check
          %p428 = pneg %p54
        $region145: #{attention_forward.4} parent=142 // pred_check_branch
          %430 = sbr.rel (%p428) target = $region147
        $region146: #{attention_forward.4} parent=142 // pred_region
          _
        $region147: #{attention_forward.4} parent=142 // pred_fallthru
          _
        %s431 = sand.u32 %s67, 1
        %s432 = sand.u32 %s67, 1
        %s433 = smul.addr %s432, 16
        %s434 = scalar_lea.vmem [#allocation3], %s433
        // Predicated region
        $region148: #{attention_forward.4} parent=142 // pred_check
          %p435 = pneg %p80
        $region149: #{attention_forward.4} parent=142 // pred_check_branch
          %437 = sbr.rel (%p435) target = $region151
        $region150: #{attention_forward.4} parent=142 // pred_region
          _
        $region151: #{attention_forward.4} parent=142 // pred_fallthru
          _
        %s438 = sand.u32 %s93, 1
        %s439 = sand.u32 %s93, 1
        %s440 = smul.addr %s439, 16
        %s441 = scalar_lea.vmem [#allocation4], %s440
        // Predicated region
        $region152: #{attention_forward.4} parent=142 // pred_check
          %p442 = pneg %p106
        $region153: #{attention_forward.4} parent=142 // pred_check_branch
          %444 = sbr.rel (%p442) target = $region155
        $region154: #{attention_forward.4} parent=142 // pred_region
          _
        $region155: #{attention_forward.4} parent=142 // pred_fallthru
          _
        %s445 = sand.u32 %s41, 1
        %s446 = sand.u32 %s41, 1
        %s447 = smul.addr %s446, 16
        %s448 = scalar_lea.vmem [#allocation2], %s447
        %p449 = pneg %p54
        %p450 = pneg %p51
        %s451 = sand.u32 %s67, 1
        %s452 = sand.u32 %s67, 1
        %s453 = smul.addr %s452, 16
        %s454 = scalar_lea.vmem [#allocation3], %s453
        %p455 = pneg %p80
        %p456 = pneg %p77
        %s457 = sand.u32 %s93, 1
        %s458 = sand.u32 %s93, 1
        %s459 = smul.addr %s458, 16
        %s460 = scalar_lea.vmem [#allocation4], %s459
        %p461 = pneg %p106
        %p462 = pneg %p103
        %p463 = pneg %p134
        %p464 = pneg %p131
        %s465 = sand.u32 %s121, 1
        %s466 = scalar_lea.sflag [#allocation6], %s465
        %s467 = sand.u32 %s121, 1
        %s468 = smul.addr %s467, 32
        %s469 = scalar_lea.vmem [#allocation5], %s468
        %p470 = pneg %p162
        %p471 = pneg %p159
        %p472 = scmp.lt.s32.totalorder %s23, 1
        %s473 = scalar_select %p472, %s23, 1
        %p474 = scmp.lt.s32.totalorder %s24, 0
        %s475 = scalar_select %p474, %s24, 0
        %s476 = sadd.s32 %s475, %s473
        %s477 = smul.addr %s476, 4
        %s478 = scalar_lea.vmem %s4, %s477
        %s479 = smul.u32 8, %s24
        %p480 = scmp.lt.s32.totalorder %s23, 1
        %s481 = scalar_select %p480, %s23, 1
        %p482 = scmp.lt.s32.totalorder %s24, 0
        %s483 = scalar_select %p482, %s24, 0
        %s484 = sadd.s32 %s483, %s481
        %s485 = smul.addr %s484, 4
        %s486 = scalar_lea.vmem %s4, %s485
        %v488 = vld [vmem:[%s427] sm:$0x1]
        %v489 = vld [vmem:[%s427 + $0x2] sm:$0x1]
        %v490 = vld [vmem:[%s427 + $0x4] sm:$0x1]
        %v491 = vld [vmem:[%s427 + $0x6] sm:$0x1]
        %v492 = vld [vmem:[%s427 + $0x8] sm:$0x1]
        %v493 = vld [vmem:[%s427 + $0xa] sm:$0x1]
        %v494 = vld [vmem:[%s427 + $0xc] sm:$0x1]
        %v495 = vld [vmem:[%s427 + $0xe] sm:$0x1]
        %v496 = vld [vmem:[%s434] sm:$0x1]
        %v497 = vld [vmem:[%s434 + $0x2] sm:$0x1]
        %v498 = vld [vmem:[%s434 + $0x4] sm:$0x1]
        %v499 = vld [vmem:[%s434 + $0x6] sm:$0x1]
        %v500 = vld [vmem:[%s434 + $0x8] sm:$0x1]
        %v501 = vld [vmem:[%s434 + $0xa] sm:$0x1]
        %v502 = vld [vmem:[%s434 + $0xc] sm:$0x1]
        %v503 = vld [vmem:[%s434 + $0xe] sm:$0x1]
        %v504 = vld [vmem:[%s441] sm:$0x1]
        %v505 = vld [vmem:[%s441 + $0x2] sm:$0x1]
        %v506 = vld [vmem:[%s441 + $0x4] sm:$0x1]
        %v507 = vld [vmem:[%s441 + $0x6] sm:$0x1]
        %v508 = vld [vmem:[%s441 + $0x8] sm:$0x1]
        %v509 = vld [vmem:[%s441 + $0xa] sm:$0x1]
        %v510 = vld [vmem:[%s441 + $0xc] sm:$0x1]
        %v511 = vld [vmem:[%s441 + $0xe] sm:$0x1]
        %v521 = vunpack.c.l.s4 1983009808
        %v522 = vunpack.c.0.s8 %v521
        %v523 = vlaneseq
        %v524 = vshrl.u32 %v523, 7
        %v525 = vsub.s32 %v522, %v524
        %v526 = vrot.slane %v488, %v525
        %v528 = vunpack.c.l.s4 1983009808
        %v529 = vunpack.c.0.s8 %v528
        %v530 = vlaneseq
        %v531 = vshrl.u32 %v530, 7
        %v532 = vsub.s32 %v529, %v531
        %v533 = vrot.slane %v489, %v532
        %v535 = vunpack.c.l.s4 1983009808
        %v536 = vunpack.c.0.s8 %v535
        %v537 = vlaneseq
        %v538 = vshrl.u32 %v537, 7
        %v539 = vsub.s32 %v536, %v538
        %v540 = vrot.slane %v490, %v539
        %v542 = vunpack.c.l.s4 1983009808
        %v543 = vunpack.c.0.s8 %v542
        %v544 = vlaneseq
        %v545 = vshrl.u32 %v544, 7
        %v546 = vsub.s32 %v543, %v545
        %v547 = vrot.slane %v491, %v546
        %v549 = vunpack.c.l.s4 1983009808
        %v550 = vunpack.c.0.s8 %v549
        %v551 = vlaneseq
        %v552 = vshrl.u32 %v551, 7
        %v553 = vsub.s32 %v550, %v552
        %v554 = vrot.slane %v492, %v553
        %v556 = vunpack.c.l.s4 1983009808
        %v557 = vunpack.c.0.s8 %v556
        %v558 = vlaneseq
        %v559 = vshrl.u32 %v558, 7
        %v560 = vsub.s32 %v557, %v559
        %v561 = vrot.slane %v493, %v560
        %v563 = vunpack.c.l.s4 1983009808
        %v564 = vunpack.c.0.s8 %v563
        %v565 = vlaneseq
        %v566 = vshrl.u32 %v565, 7
        %v567 = vsub.s32 %v564, %v566
        %v568 = vrot.slane %v494, %v567
        %v570 = vunpack.c.l.s4 1983009808
        %v571 = vunpack.c.0.s8 %v570
        %v572 = vlaneseq
        %v573 = vshrl.u32 %v572, 7
        %v574 = vsub.s32 %v571, %v573
        %v575 = vrot.slane %v495, %v574
        %v576 = vunpack.c.l.b16 %v526
        %v577 = vunpack.c.l.b16 %v533
        %v578 = vunpack.c.l.b16 %v540
        %v579 = vunpack.c.l.b16 %v547
        %v580 = vunpack.c.l.b16 %v554
        %v581 = vunpack.c.l.b16 %v561
        %v582 = vunpack.c.l.b16 %v568
        %v583 = vunpack.c.l.b16 %v575
        %v584 = vrot.slane %v577, 7
        %vm585 = vcmask 1041409
        %v586 = vsel %vm585, %v584, %v576
        %v587 = vrot.slane %v578, 6
        %vm588 = vcmask 1042434
        %v589 = vsel %vm588, %v587, %v586
        %v590 = vrot.slane %v579, 5
        %vm591 = vcmask 1043459
        %v592 = vsel %vm591, %v590, %v589
        %v593 = vrot.slane %v580, 4
        %vm594 = vcmask 1044484
        %v595 = vsel %vm594, %v593, %v592
        %v596 = vrot.slane %v581, 3
        %vm597 = vcmask 1045509
        %v598 = vsel %vm597, %v596, %v595
        %v599 = vrot.slane %v582, 2
        %vm600 = vcmask 1046534
        %v601 = vsel %vm600, %v599, %v598
        %v602 = vrot.slane %v583, 1
        %vm603 = vcmask 1047559
        %v604 = vsel %vm603, %v602, %v601
        %v605 = vpack.c.b16 %v604, %v604
        %v615 = vunpack.c.l.s4 1983009808
        %v616 = vunpack.c.0.s8 %v615
        %v617 = vlaneseq
        %v618 = vshrl.u32 %v617, 7
        %v619 = vsub.s32 %v616, %v618
        %v620 = vrot.slane %v496, %v619
        %v622 = vunpack.c.l.s4 1983009808
        %v623 = vunpack.c.0.s8 %v622
        %v624 = vlaneseq
        %v625 = vshrl.u32 %v624, 7
        %v626 = vsub.s32 %v623, %v625
        %v627 = vrot.slane %v497, %v626
        %v629 = vunpack.c.l.s4 1983009808
        %v630 = vunpack.c.0.s8 %v629
        %v631 = vlaneseq
        %v632 = vshrl.u32 %v631, 7
        %v633 = vsub.s32 %v630, %v632
        %v634 = vrot.slane %v498, %v633
        %v636 = vunpack.c.l.s4 1983009808
        %v637 = vunpack.c.0.s8 %v636
        %v638 = vlaneseq
        %v639 = vshrl.u32 %v638, 7
        %v640 = vsub.s32 %v637, %v639
        %v641 = vrot.slane %v499, %v640
        %v643 = vunpack.c.l.s4 1983009808
        %v644 = vunpack.c.0.s8 %v643
        %v645 = vlaneseq
        %v646 = vshrl.u32 %v645, 7
        %v647 = vsub.s32 %v644, %v646
        %v648 = vrot.slane %v500, %v647
        %v650 = vunpack.c.l.s4 1983009808
        %v651 = vunpack.c.0.s8 %v650
        %v652 = vlaneseq
        %v653 = vshrl.u32 %v652, 7
        %v654 = vsub.s32 %v651, %v653
        %v655 = vrot.slane %v501, %v654
        %v657 = vunpack.c.l.s4 1983009808
        %v658 = vunpack.c.0.s8 %v657
        %v659 = vlaneseq
        %v660 = vshrl.u32 %v659, 7
        %v661 = vsub.s32 %v658, %v660
        %v662 = vrot.slane %v502, %v661
        %v664 = vunpack.c.l.s4 1983009808
        %v665 = vunpack.c.0.s8 %v664
        %v666 = vlaneseq
        %v667 = vshrl.u32 %v666, 7
        %v668 = vsub.s32 %v665, %v667
        %v669 = vrot.slane %v503, %v668
        %v670 = vunpack.c.l.b16 %v620
        %v671 = vunpack.c.l.b16 %v627
        %v672 = vunpack.c.l.b16 %v634
        %v673 = vunpack.c.l.b16 %v641
        %v674 = vunpack.c.l.b16 %v648
        %v675 = vunpack.c.l.b16 %v655
        %v676 = vunpack.c.l.b16 %v662
        %v677 = vunpack.c.l.b16 %v669
        %v678 = vrot.slane %v671, 7
        %v679 = vsel %vm585, %v678, %v670
        %v680 = vrot.slane %v672, 6
        %v681 = vsel %vm588, %v680, %v679
        %v682 = vrot.slane %v673, 5
        %v683 = vsel %vm591, %v682, %v681
        %v684 = vrot.slane %v674, 4
        %v685 = vsel %vm594, %v684, %v683
        %v686 = vrot.slane %v675, 3
        %v687 = vsel %vm597, %v686, %v685
        %v688 = vrot.slane %v676, 2
        %v689 = vsel %vm600, %v688, %v687
        %v690 = vrot.slane %v677, 1
        %v691 = vsel %vm603, %v690, %v689
        %v692 = vpack.c.b16 %v691, %v691
        %vm693 = vcmask 64512
        %v695 = vsel %vm693, %v605, 0
        %v698 = vsel %vm693, %v692, 0
        %700 = vmatprep.subr.bf16.mxu0 0
        %701 = vmatpush1.bf16.xpose.msra.mxu0 %v698
        %702 = vmatprep.subr.bf16.mxu0 0
        %703 = vmatpush1.bf16.xpose.msra.mxu0 0
        %704 = vmatprep.subr.bf16.mxu0 0
        %705 = vmatpush1.bf16.xpose.msra.mxu0 0
        %706 = vmatprep.subr.bf16.mxu0 0
        %707 = vmatpush1.bf16.xpose.msra.mxu0 0
        %708 = vmatprep.subr.bf16.mxu0 0
        %709 = vmatpush1.bf16.xpose.msra.mxu0 0
        %710 = vmatprep.subr.bf16.mxu0 0
        %711 = vmatpush1.bf16.xpose.msra.mxu0 0
        %712 = vmatprep.subr.bf16.mxu0 0
        %713 = vmatpush1.bf16.xpose.msra.mxu0 0
        %714 = vmatprep.subr.bf16.mxu0 0
        %715 = vmatpush1.bf16.xpose.msra.mxu0 0
        %716 = vmatprep.subr.bf16.mxu0 0
        %717 = vmatpush1.bf16.xpose.msra.mxu0 0
        %718 = vmatprep.subr.bf16.mxu0 0
        %719 = vmatpush1.bf16.xpose.msra.mxu0 0
        %720 = vmatprep.subr.bf16.mxu0 0
        %721 = vmatpush1.bf16.xpose.msra.mxu0 0
        %722 = vmatprep.subr.bf16.mxu0 0
        %723 = vmatpush1.bf16.xpose.msra.mxu0 0
        %724 = vmatprep.subr.bf16.mxu0 0
        %725 = vmatpush1.bf16.xpose.msra.mxu0 0
        %726 = vmatprep.subr.bf16.mxu0 0
        %727 = vmatpush1.bf16.xpose.msra.mxu0 0
        %728 = vmatprep.subr.bf16.mxu0 0
        %729 = vmatpush1.bf16.xpose.msra.mxu0 0
        %730 = vmatprep.subr.bf16.mxu0 0
        %731 = vmatpush1.bf16.xpose.msra.mxu0 0
        %732 = vmatprep.mubr.bf16.mxu0 0
        %733 = vmatmul.mubr.bf16.gmra.mrb[0].mxu0 %v695
        %v734 = vpop.f32.mrb[0].mxu0
        %v735 = vadd.f32 0.0, %v734
        %v736 = vpop.f32.mrb[0].mxu0
        %v737 = vpop.f32.mrb[0].mxu0
        %v738 = vpop.f32.mrb[0].mxu0
        %739 = vdwg.mxu0
        %v740 = vsel %vm693, %v735, -inf
        %741 = vmax.xlane.f32.xlu0 %v740
        %v742 = vpop.xlane.xlu0 %741
        %v743 = vsub.f32 %v735, %v742
        %v744 = vmul.f32 %v743, 1.442695
        %v745 = vpow.pop %v744
        %v746 = vsel %vm693, %v745, 0.0
        %747 = vadd.xlane.f32.xlu0 %v746
        %v748 = vpop.xlane.xlu0 %747
        %v749 = vrcp.pop %v748
        %v750 = vmul.f32 %v745, %v749
        %751 = vst.msk [vmem:[%s469] sm:$0xff] %vm693, %v750
        %v752 = vpack.c.bf16 %v750, %v750
        %v762 = vunpack.c.l.s4 1983009808
        %v763 = vunpack.c.0.s8 %v762
        %v764 = vlaneseq
        %v765 = vshrl.u32 %v764, 7
        %v766 = vsub.s32 %v763, %v765
        %v767 = vrot.slane %v504, %v766
        %v769 = vunpack.c.l.s4 1983009808
        %v770 = vunpack.c.0.s8 %v769
        %v771 = vlaneseq
        %v772 = vshrl.u32 %v771, 7
        %v773 = vsub.s32 %v770, %v772
        %v774 = vrot.slane %v505, %v773
        %v776 = vunpack.c.l.s4 1983009808
        %v777 = vunpack.c.0.s8 %v776
        %v778 = vlaneseq
        %v779 = vshrl.u32 %v778, 7
        %v780 = vsub.s32 %v777, %v779
        %v781 = vrot.slane %v506, %v780
        %v783 = vunpack.c.l.s4 1983009808
        %v784 = vunpack.c.0.s8 %v783
        %v785 = vlaneseq
        %v786 = vshrl.u32 %v785, 7
        %v787 = vsub.s32 %v784, %v786
        %v788 = vrot.slane %v507, %v787
        %v790 = vunpack.c.l.s4 1983009808
        %v791 = vunpack.c.0.s8 %v790
        %v792 = vlaneseq
        %v793 = vshrl.u32 %v792, 7
        %v794 = vsub.s32 %v791, %v793
        %v795 = vrot.slane %v508, %v794
        %v797 = vunpack.c.l.s4 1983009808
        %v798 = vunpack.c.0.s8 %v797
        %v799 = vlaneseq
        %v800 = vshrl.u32 %v799, 7
        %v801 = vsub.s32 %v798, %v800
        %v802 = vrot.slane %v509, %v801
        %v804 = vunpack.c.l.s4 1983009808
        %v805 = vunpack.c.0.s8 %v804
        %v806 = vlaneseq
        %v807 = vshrl.u32 %v806, 7
        %v808 = vsub.s32 %v805, %v807
        %v809 = vrot.slane %v510, %v808
        %v811 = vunpack.c.l.s4 1983009808
        %v812 = vunpack.c.0.s8 %v811
        %v813 = vlaneseq
        %v814 = vshrl.u32 %v813, 7
        %v815 = vsub.s32 %v812, %v814
        %v816 = vrot.slane %v511, %v815
        %v817 = vunpack.c.l.b16 %v767
        %v818 = vunpack.c.l.b16 %v774
        %v819 = vunpack.c.l.b16 %v781
        %v820 = vunpack.c.l.b16 %v788
        %v821 = vunpack.c.l.b16 %v795
        %v822 = vunpack.c.l.b16 %v802
        %v823 = vunpack.c.l.b16 %v809
        %v824 = vunpack.c.l.b16 %v816
        %v825 = vrot.slane %v818, 7
        %v826 = vsel %vm585, %v825, %v817
        %v827 = vrot.slane %v819, 6
        %v828 = vsel %vm588, %v827, %v826
        %v829 = vrot.slane %v820, 5
        %v830 = vsel %vm591, %v829, %v828
        %v831 = vrot.slane %v821, 4
        %v832 = vsel %vm594, %v831, %v830
        %v833 = vrot.slane %v822, 3
        %v834 = vsel %vm597, %v833, %v832
        %v835 = vrot.slane %v823, 2
        %v836 = vsel %vm600, %v835, %v834
        %v837 = vrot.slane %v824, 1
        %v838 = vsel %vm603, %v837, %v836
        %v839 = vpack.c.b16 %v838, %v838
        %v841 = vsel %vm693, %v752, 0
        %vm843 = vcmask 1043456
        %v845 = vsel %vm843, %v839, 0
        %847 = vmatprep.subr.bf16.mxu0 0
        %848 = vmatpush1.bf16.msra.mxu0 %v845
        %849 = vmatprep.subr.bf16.mxu0 0
        %850 = vmatpush1.bf16.msra.mxu0 0
        %851 = vmatprep.subr.bf16.mxu0 0
        %852 = vmatpush1.bf16.msra.mxu0 0
        %853 = vmatprep.subr.bf16.mxu0 0
        %854 = vmatpush1.bf16.msra.mxu0 0
        %855 = vmatprep.subr.bf16.mxu0 0
        %856 = vmatpush1.bf16.msra.mxu0 0
        %857 = vmatprep.subr.bf16.mxu0 0
        %858 = vmatpush1.bf16.msra.mxu0 0
        %859 = vmatprep.subr.bf16.mxu0 0
        %860 = vmatpush1.bf16.msra.mxu0 0
        %861 = vmatprep.subr.bf16.mxu0 0
        %862 = vmatpush1.bf16.msra.mxu0 0
        %863 = vmatprep.subr.bf16.mxu0 0
        %864 = vmatpush1.bf16.msra.mxu0 0
        %865 = vmatprep.subr.bf16.mxu0 0
        %866 = vmatpush1.bf16.msra.mxu0 0
        %867 = vmatprep.subr.bf16.mxu0 0
        %868 = vmatpush1.bf16.msra.mxu0 0
        %869 = vmatprep.subr.bf16.mxu0 0
        %870 = vmatpush1.bf16.msra.mxu0 0
        %871 = vmatprep.subr.bf16.mxu0 0
        %872 = vmatpush1.bf16.msra.mxu0 0
        %873 = vmatprep.subr.bf16.mxu0 0
        %874 = vmatpush1.bf16.msra.mxu0 0
        %875 = vmatprep.subr.bf16.mxu0 0
        %876 = vmatpush1.bf16.msra.mxu0 0
        %877 = vmatprep.subr.bf16.mxu0 0
        %878 = vmatpush1.bf16.msra.mxu0 0
        %879 = vmatprep.mubr.bf16.mxu0 0
        %880 = vmatmul.mubr.bf16.gmra.mrb[0].mxu0 %v841
        %v881 = vpop.f32.mrb[0].mxu0
        %v882 = vadd.f32 0.0, %v881
        %v883 = vpop.f32.mrb[0].mxu0
        %v884 = vpop.f32.mrb[0].mxu0
        %v885 = vpop.f32.mrb[0].mxu0
        %886 = vdwg.mxu0
        %v887 = vpack.c.bf16 %v882, %v882
        %vm888 = vcmask 60416
        %889 = vst.msk [vmem:[%s486] sm:$0xf] %vm888, %v887
        %v890 = vld [vmem:[%s427] sm:$0x1]
        %v891 = vld [vmem:[%s427 + $0x2] sm:$0x1]
        %v892 = vld [vmem:[%s427 + $0x4] sm:$0x1]
        %v893 = vld [vmem:[%s427 + $0x6] sm:$0x1]
        %v894 = vld [vmem:[%s427 + $0x8] sm:$0x1]
        %v895 = vld [vmem:[%s427 + $0xa] sm:$0x1]
        %v896 = vld [vmem:[%s427 + $0xc] sm:$0x1]
        %v897 = vld [vmem:[%s427 + $0xe] sm:$0x1]
        %v898 = vld [vmem:[%s434] sm:$0x1]
        %v899 = vld [vmem:[%s434 + $0x2] sm:$0x1]
        %v900 = vld [vmem:[%s434 + $0x4] sm:$0x1]
        %v901 = vld [vmem:[%s434 + $0x6] sm:$0x1]
        %v902 = vld [vmem:[%s434 + $0x8] sm:$0x1]
        %v903 = vld [vmem:[%s434 + $0xa] sm:$0x1]
        %v904 = vld [vmem:[%s434 + $0xc] sm:$0x1]
        %v905 = vld [vmem:[%s434 + $0xe] sm:$0x1]
        %v906 = vld [vmem:[%s441] sm:$0x1]
        %v907 = vld [vmem:[%s441 + $0x2] sm:$0x1]
        %v908 = vld [vmem:[%s441 + $0x4] sm:$0x1]
        %v909 = vld [vmem:[%s441 + $0x6] sm:$0x1]
        %v910 = vld [vmem:[%s441 + $0x8] sm:$0x1]
        %v911 = vld [vmem:[%s441 + $0xa] sm:$0x1]
        %v912 = vld [vmem:[%s441 + $0xc] sm:$0x1]
        %v913 = vld [vmem:[%s441 + $0xe] sm:$0x1]
        %v923 = vunpack.c.l.s4 1983009808
        %v924 = vunpack.c.0.s8 %v923
        %v925 = vlaneseq
        %v926 = vshrl.u32 %v925, 7
        %v927 = vsub.s32 %v924, %v926
        %v928 = vrot.slane %v890, %v927
        %v930 = vunpack.c.l.s4 1983009808
        %v931 = vunpack.c.0.s8 %v930
        %v932 = vlaneseq
        %v933 = vshrl.u32 %v932, 7
        %v934 = vsub.s32 %v931, %v933
        %v935 = vrot.slane %v891, %v934
        %v937 = vunpack.c.l.s4 1983009808
        %v938 = vunpack.c.0.s8 %v937
        %v939 = vlaneseq
        %v940 = vshrl.u32 %v939, 7
        %v941 = vsub.s32 %v938, %v940
        %v942 = vrot.slane %v892, %v941
        %v944 = vunpack.c.l.s4 1983009808
        %v945 = vunpack.c.0.s8 %v944
        %v946 = vlaneseq
        %v947 = vshrl.u32 %v946, 7
        %v948 = vsub.s32 %v945, %v947
        %v949 = vrot.slane %v893, %v948
        %v951 = vunpack.c.l.s4 1983009808
        %v952 = vunpack.c.0.s8 %v951
        %v953 = vlaneseq
        %v954 = vshrl.u32 %v953, 7
        %v955 = vsub.s32 %v952, %v954
        %v956 = vrot.slane %v894, %v955
        %v958 = vunpack.c.l.s4 1983009808
        %v959 = vunpack.c.0.s8 %v958
        %v960 = vlaneseq
        %v961 = vshrl.u32 %v960, 7
        %v962 = vsub.s32 %v959, %v961
        %v963 = vrot.slane %v895, %v962
        %v965 = vunpack.c.l.s4 1983009808
        %v966 = vunpack.c.0.s8 %v965
        %v967 = vlaneseq
        %v968 = vshrl.u32 %v967, 7
        %v969 = vsub.s32 %v966, %v968
        %v970 = vrot.slane %v896, %v969
        %v972 = vunpack.c.l.s4 1983009808
        %v973 = vunpack.c.0.s8 %v972
        %v974 = vlaneseq
        %v975 = vshrl.u32 %v974, 7
        %v976 = vsub.s32 %v973, %v975
        %v977 = vrot.slane %v897, %v976
        %v978 = vunpack.c.l.b16 %v928
        %v979 = vunpack.c.l.b16 %v935
        %v980 = vunpack.c.l.b16 %v942
        %v981 = vunpack.c.l.b16 %v949
        %v982 = vunpack.c.l.b16 %v956
        %v983 = vunpack.c.l.b16 %v963
        %v984 = vunpack.c.l.b16 %v970
        %v985 = vunpack.c.l.b16 %v977
        %v986 = vrot.slane %v978, 1
        %v987 = vsel %vm585, %v979, %v986
        %v988 = vrot.slane %v980, 7
        %v989 = vsel %vm588, %v988, %v987
        %v990 = vrot.slane %v981, 6
        %v991 = vsel %vm591, %v990, %v989
        %v992 = vrot.slane %v982, 5
        %v993 = vsel %vm594, %v992, %v991
        %v994 = vrot.slane %v983, 4
        %v995 = vsel %vm597, %v994, %v993
        %v996 = vrot.slane %v984, 3
        %v997 = vsel %vm600, %v996, %v995
        %v998 = vrot.slane %v985, 2
        %v999 = vsel %vm603, %v998, %v997
        %v1000 = vpack.c.b16 %v999, %v999
        %v1010 = vunpack.c.l.s4 1983009808
        %v1011 = vunpack.c.0.s8 %v1010
        %v1012 = vlaneseq
        %v1013 = vshrl.u32 %v1012, 7
        %v1014 = vsub.s32 %v1011, %v1013
        %v1015 = vrot.slane %v898, %v1014
        %v1017 = vunpack.c.l.s4 1983009808
        %v1018 = vunpack.c.0.s8 %v1017
        %v1019 = vlaneseq
        %v1020 = vshrl.u32 %v1019, 7
        %v1021 = vsub.s32 %v1018, %v1020
        %v1022 = vrot.slane %v899, %v1021
        %v1024 = vunpack.c.l.s4 1983009808
        %v1025 = vunpack.c.0.s8 %v1024
        %v1026 = vlaneseq
        %v1027 = vshrl.u32 %v1026, 7
        %v1028 = vsub.s32 %v1025, %v1027
        %v1029 = vrot.slane %v900, %v1028
        %v1031 = vunpack.c.l.s4 1983009808
        %v1032 = vunpack.c.0.s8 %v1031
        %v1033 = vlaneseq
        %v1034 = vshrl.u32 %v1033, 7
        %v1035 = vsub.s32 %v1032, %v1034
        %v1036 = vrot.slane %v901, %v1035
        %v1038 = vunpack.c.l.s4 1983009808
        %v1039 = vunpack.c.0.s8 %v1038
        %v1040 = vlaneseq
        %v1041 = vshrl.u32 %v1040, 7
        %v1042 = vsub.s32 %v1039, %v1041
        %v1043 = vrot.slane %v902, %v1042
        %v1045 = vunpack.c.l.s4 1983009808
        %v1046 = vunpack.c.0.s8 %v1045
        %v1047 = vlaneseq
        %v1048 = vshrl.u32 %v1047, 7
        %v1049 = vsub.s32 %v1046, %v1048
        %v1050 = vrot.slane %v903, %v1049
        %v1052 = vunpack.c.l.s4 1983009808
        %v1053 = vunpack.c.0.s8 %v1052
        %v1054 = vlaneseq
        %v1055 = vshrl.u32 %v1054, 7
        %v1056 = vsub.s32 %v1053, %v1055
        %v1057 = vrot.slane %v904, %v1056
        %v1059 = vunpack.c.l.s4 1983009808
        %v1060 = vunpack.c.0.s8 %v1059
        %v1061 = vlaneseq
        %v1062 = vshrl.u32 %v1061, 7
        %v1063 = vsub.s32 %v1060, %v1062
        %v1064 = vrot.slane %v905, %v1063
        %v1065 = vunpack.c.l.b16 %v1015
        %v1066 = vunpack.c.l.b16 %v1022
        %v1067 = vunpack.c.l.b16 %v1029
        %v1068 = vunpack.c.l.b16 %v1036
        %v1069 = vunpack.c.l.b16 %v1043
        %v1070 = vunpack.c.l.b16 %v1050
        %v1071 = vunpack.c.l.b16 %v1057
        %v1072 = vunpack.c.l.b16 %v1064
        %v1073 = vrot.slane %v1065, 1
        %v1074 = vsel %vm585, %v1066, %v1073
        %v1075 = vrot.slane %v1067, 7
        %v1076 = vsel %vm588, %v1075, %v1074
        %v1077 = vrot.slane %v1068, 6
        %v1078 = vsel %vm591, %v1077, %v1076
        %v1079 = vrot.slane %v1069, 5
        %v1080 = vsel %vm594, %v1079, %v1078
        %v1081 = vrot.slane %v1070, 4
        %v1082 = vsel %vm597, %v1081, %v1080
        %v1083 = vrot.slane %v1071, 3
        %v1084 = vsel %vm600, %v1083, %v1082
        %v1085 = vrot.slane %v1072, 2
        %v1086 = vsel %vm603, %v1085, %v1084
        %v1087 = vpack.c.b16 %v1086, %v1086
        %v1089 = vsel %vm693, %v1000, 0
        %v1092 = vsel %vm693, %v1087, 0
        %1094 = vmatprep.subr.bf16.mxu0 0
        %1095 = vmatpush1.bf16.xpose.msra.mxu0 %v1092
        %1096 = vmatprep.subr.bf16.mxu0 0
        %1097 = vmatpush1.bf16.xpose.msra.mxu0 0
        %1098 = vmatprep.subr.bf16.mxu0 0
        %1099 = vmatpush1.bf16.xpose.msra.mxu0 0
        %1100 = vmatprep.subr.bf16.mxu0 0
        %1101 = vmatpush1.bf16.xpose.msra.mxu0 0
        %1102 = vmatprep.subr.bf16.mxu0 0
        %1103 = vmatpush1.bf16.xpose.msra.mxu0 0
        %1104 = vmatprep.subr.bf16.mxu0 0
        %1105 = vmatpush1.bf16.xpose.msra.mxu0 0
        %1106 = vmatprep.subr.bf16.mxu0 0
        %1107 = vmatpush1.bf16.xpose.msra.mxu0 0
        %1108 = vmatprep.subr.bf16.mxu0 0
        %1109 = vmatpush1.bf16.xpose.msra.mxu0 0
        %1110 = vmatprep.subr.bf16.mxu0 0
        %1111 = vmatpush1.bf16.xpose.msra.mxu0 0
        %1112 = vmatprep.subr.bf16.mxu0 0
        %1113 = vmatpush1.bf16.xpose.msra.mxu0 0
        %1114 = vmatprep.subr.bf16.mxu0 0
        %1115 = vmatpush1.bf16.xpose.msra.mxu0 0
        %1116 = vmatprep.subr.bf16.mxu0 0
        %1117 = vmatpush1.bf16.xpose.msra.mxu0 0
        %1118 = vmatprep.subr.bf16.mxu0 0
        %1119 = vmatpush1.bf16.xpose.msra.mxu0 0
        %1120 = vmatprep.subr.bf16.mxu0 0
        %1121 = vmatpush1.bf16.xpose.msra.mxu0 0
        %1122 = vmatprep.subr.bf16.mxu0 0
        %1123 = vmatpush1.bf16.xpose.msra.mxu0 0
        %1124 = vmatprep.subr.bf16.mxu0 0
        %1125 = vmatpush1.bf16.xpose.msra.mxu0 0
        %1126 = vmatprep.mubr.bf16.mxu0 0
        %1127 = vmatmul.mubr.bf16.gmra.mrb[0].mxu0 %v1089
        %v1128 = vpop.f32.mrb[0].mxu0
        %v1129 = vadd.f32 0.0, %v1128
        %v1130 = vpop.f32.mrb[0].mxu0
        %v1131 = vpop.f32.mrb[0].mxu0
        %v1132 = vpop.f32.mrb[0].mxu0
        %1133 = vdwg.mxu0
        %v1134 = vsel %vm693, %v1129, -inf
        %1135 = vmax.xlane.f32.xlu0 %v1134
        %v1136 = vpop.xlane.xlu0 %1135
        %v1137 = vsub.f32 %v1129, %v1136
        %v1138 = vmul.f32 %v1137, 1.442695
        %v1139 = vpow.pop %v1138
        %v1140 = vsel %vm693, %v1139, 0.0
        %1141 = vadd.xlane.f32.xlu0 %v1140
        %v1142 = vpop.xlane.xlu0 %1141
        %v1143 = vrcp.pop %v1142
        %v1144 = vmul.f32 %v1139, %v1143
        %s1145 = scalar_lea.vmem %s469, 8 [#allocation5]
        %1146 = vst.msk [vmem:[%s1145] sm:$0xff] %vm693, %v1144
        %v1147 = vpack.c.bf16 %v1144, %v1144
        %v1157 = vunpack.c.l.s4 1983009808
        %v1158 = vunpack.c.0.s8 %v1157
        %v1159 = vlaneseq
        %v1160 = vshrl.u32 %v1159, 7
        %v1161 = vsub.s32 %v1158, %v1160
        %v1162 = vrot.slane %v906, %v1161
        %v1164 = vunpack.c.l.s4 1983009808
        %v1165 = vunpack.c.0.s8 %v1164
        %v1166 = vlaneseq
        %v1167 = vshrl.u32 %v1166, 7
        %v1168 = vsub.s32 %v1165, %v1167
        %v1169 = vrot.slane %v907, %v1168
        %v1171 = vunpack.c.l.s4 1983009808
        %v1172 = vunpack.c.0.s8 %v1171
        %v1173 = vlaneseq
        %v1174 = vshrl.u32 %v1173, 7
        %v1175 = vsub.s32 %v1172, %v1174
        %v1176 = vrot.slane %v908, %v1175
        %v1178 = vunpack.c.l.s4 1983009808
        %v1179 = vunpack.c.0.s8 %v1178
        %v1180 = vlaneseq
        %v1181 = vshrl.u32 %v1180, 7
        %v1182 = vsub.s32 %v1179, %v1181
        %v1183 = vrot.slane %v909, %v1182
        %v1185 = vunpack.c.l.s4 1983009808
        %v1186 = vunpack.c.0.s8 %v1185
        %v1187 = vlaneseq
        %v1188 = vshrl.u32 %v1187, 7
        %v1189 = vsub.s32 %v1186, %v1188
        %v1190 = vrot.slane %v910, %v1189
        %v1192 = vunpack.c.l.s4 1983009808
        %v1193 = vunpack.c.0.s8 %v1192
        %v1194 = vlaneseq
        %v1195 = vshrl.u32 %v1194, 7
        %v1196 = vsub.s32 %v1193, %v1195
        %v1197 = vrot.slane %v911, %v1196
        %v1199 = vunpack.c.l.s4 1983009808
        %v1200 = vunpack.c.0.s8 %v1199
        %v1201 = vlaneseq
        %v1202 = vshrl.u32 %v1201, 7
        %v1203 = vsub.s32 %v1200, %v1202
        %v1204 = vrot.slane %v912, %v1203
        %v1206 = vunpack.c.l.s4 1983009808
        %v1207 = vunpack.c.0.s8 %v1206
        %v1208 = vlaneseq
        %v1209 = vshrl.u32 %v1208, 7
        %v1210 = vsub.s32 %v1207, %v1209
        %v1211 = vrot.slane %v913, %v1210
        %v1212 = vunpack.c.l.b16 %v1162
        %v1213 = vunpack.c.l.b16 %v1169
        %v1214 = vunpack.c.l.b16 %v1176
        %v1215 = vunpack.c.l.b16 %v1183
        %v1216 = vunpack.c.l.b16 %v1190
        %v1217 = vunpack.c.l.b16 %v1197
        %v1218 = vunpack.c.l.b16 %v1204
        %v1219 = vunpack.c.l.b16 %v1211
        %v1220 = vrot.slane %v1212, 1
        %v1221 = vsel %vm585, %v1213, %v1220
        %v1222 = vrot.slane %v1214, 7
        %v1223 = vsel %vm588, %v1222, %v1221
        %v1224 = vrot.slane %v1215, 6
        %v1225 = vsel %vm591, %v1224, %v1223
        %v1226 = vrot.slane %v1216, 5
        %v1227 = vsel %vm594, %v1226, %v1225
        %v1228 = vrot.slane %v1217, 4
        %v1229 = vsel %vm597, %v1228, %v1227
        %v1230 = vrot.slane %v1218, 3
        %v1231 = vsel %vm600, %v1230, %v1229
        %v1232 = vrot.slane %v1219, 2
        %v1233 = vsel %vm603, %v1232, %v1231
        %v1234 = vpack.c.b16 %v1233, %v1233
        %v1236 = vsel %vm693, %v1147, 0
        %v1239 = vsel %vm843, %v1234, 0
        %1241 = vmatprep.subr.bf16.mxu0 0
        %1242 = vmatpush1.bf16.msra.mxu0 %v1239
        %1243 = vmatprep.subr.bf16.mxu0 0
        %1244 = vmatpush1.bf16.msra.mxu0 0
        %1245 = vmatprep.subr.bf16.mxu0 0
        %1246 = vmatpush1.bf16.msra.mxu0 0
        %1247 = vmatprep.subr.bf16.mxu0 0
        %1248 = vmatpush1.bf16.msra.mxu0 0
        %1249 = vmatprep.subr.bf16.mxu0 0
        %1250 = vmatpush1.bf16.msra.mxu0 0
        %1251 = vmatprep.subr.bf16.mxu0 0
        %1252 = vmatpush1.bf16.msra.mxu0 0
        %1253 = vmatprep.subr.bf16.mxu0 0
        %1254 = vmatpush1.bf16.msra.mxu0 0
        %1255 = vmatprep.subr.bf16.mxu0 0
        %1256 = vmatpush1.bf16.msra.mxu0 0
        %1257 = vmatprep.subr.bf16.mxu0 0
        %1258 = vmatpush1.bf16.msra.mxu0 0
        %1259 = vmatprep.subr.bf16.mxu0 0
        %1260 = vmatpush1.bf16.msra.mxu0 0
        %1261 = vmatprep.subr.bf16.mxu0 0
        %1262 = vmatpush1.bf16.msra.mxu0 0
        %1263 = vmatprep.subr.bf16.mxu0 0
        %1264 = vmatpush1.bf16.msra.mxu0 0
        %1265 = vmatprep.subr.bf16.mxu0 0
        %1266 = vmatpush1.bf16.msra.mxu0 0
        %1267 = vmatprep.subr.bf16.mxu0 0
        %1268 = vmatpush1.bf16.msra.mxu0 0
        %1269 = vmatprep.subr.bf16.mxu0 0
        %1270 = vmatpush1.bf16.msra.mxu0 0
        %1271 = vmatprep.subr.bf16.mxu0 0
        %1272 = vmatpush1.bf16.msra.mxu0 0
        %1273 = vmatprep.mubr.bf16.mxu0 0
        %1274 = vmatmul.mubr.bf16.gmra.mrb[0].mxu0 %v1236
        %v1275 = vpop.f32.mrb[0].mxu0
        %v1276 = vadd.f32 0.0, %v1275
        %v1277 = vpop.f32.mrb[0].mxu0
        %v1278 = vpop.f32.mrb[0].mxu0
        %v1279 = vpop.f32.mrb[0].mxu0
        %1280 = vdwg.mxu0
        %v1281 = vpack.c.bf16 %v1276, %v1276
        %v1283 = vunpack.c.l.b16 %v1281
        %v1284 = vpack.c.b16 %v1283, %v1283
        %1285 = vrot.lane.b32.xlu0 %v1284, 8
        %v1286 = vpop.permute.xlu0 %1285
        %vm1288 = vcmask 126016
        %1289 = vst.msk [vmem:[%s486] sm:$0xf] %vm1288, %v1286
        %v1290 = vld [vmem:[%s427] sm:$0x2]
        %v1291 = vld [vmem:[%s427 + $0x2] sm:$0x2]
        %v1292 = vld [vmem:[%s427 + $0x4] sm:$0x2]
        %v1293 = vld [vmem:[%s427 + $0x6] sm:$0x2]
        %v1294 = vld [vmem:[%s427 + $0x8] sm:$0x2]
        %v1295 = vld [vmem:[%s427 + $0xa] sm:$0x2]
        %v1296 = vld [vmem:[%s427 + $0xc] sm:$0x2]
        %v1297 = vld [vmem:[%s427 + $0xe] sm:$0x2]
        %v1298 = vld [vmem:[%s434] sm:$0x2]
        %v1299 = vld [vmem:[%s434 + $0x2] sm:$0x2]
        %v1300 = vld [vmem:[%s434 + $0x4] sm:$0x2]
        %v1301 = vld [vmem:[%s434 + $0x6] sm:$0x2]
        %v1302 = vld [vmem:[%s434 + $0x8] sm:$0x2]
        %v1303 = vld [vmem:[%s434 + $0xa] sm:$0x2]
        %v1304 = vld [vmem:[%s434 + $0xc] sm:$0x2]
        %v1305 = vld [vmem:[%s434 + $0xe] sm:$0x2]
        %v1306 = vld [vmem:[%s441] sm:$0x2]
        %v1307 = vld [vmem:[%s441 + $0x2] sm:$0x2]
        %v1308 = vld [vmem:[%s441 + $0x4] sm:$0x2]
        %v1309 = vld [vmem:[%s441 + $0x6] sm:$0x2]
        %v1310 = vld [vmem:[%s441 + $0x8] sm:$0x2]
        %v1311 = vld [vmem:[%s441 + $0xa] sm:$0x2]
        %v1312 = vld [vmem:[%s441 + $0xc] sm:$0x2]
        %v1313 = vld [vmem:[%s441 + $0xe] sm:$0x2]
        %v1323 = vunpack.c.l.s4 1983009808
        %v1324 = vunpack.c.0.s8 %v1323
        %v1325 = vlaneseq
        %v1326 = vshrl.u32 %v1325, 7
        %v1327 = vsub.s32 %v1324, %v1326
        %v1328 = vrot.slane %v1290, %v1327
        %v1330 = vunpack.c.l.s4 1983009808
        %v1331 = vunpack.c.0.s8 %v1330
        %v1332 = vlaneseq
        %v1333 = vshrl.u32 %v1332, 7
        %v1334 = vsub.s32 %v1331, %v1333
        %v1335 = vrot.slane %v1291, %v1334
        %v1337 = vunpack.c.l.s4 1983009808
        %v1338 = vunpack.c.0.s8 %v1337
        %v1339 = vlaneseq
        %v1340 = vshrl.u32 %v1339, 7
        %v1341 = vsub.s32 %v1338, %v1340
        %v1342 = vrot.slane %v1292, %v1341
        %v1344 = vunpack.c.l.s4 1983009808
        %v1345 = vunpack.c.0.s8 %v1344
        %v1346 = vlaneseq
        %v1347 = vshrl.u32 %v1346, 7
        %v1348 = vsub.s32 %v1345, %v1347
        %v1349 = vrot.slane %v1293, %v1348
        %v1351 = vunpack.c.l.s4 1983009808
        %v1352 = vunpack.c.0.s8 %v1351
        %v1353 = vlaneseq
        %v1354 = vshrl.u32 %v1353, 7
        %v1355 = vsub.s32 %v1352, %v1354
        %v1356 = vrot.slane %v1294, %v1355
        %v1358 = vunpack.c.l.s4 1983009808
        %v1359 = vunpack.c.0.s8 %v1358
        %v1360 = vlaneseq
        %v1361 = vshrl.u32 %v1360, 7
        %v1362 = vsub.s32 %v1359, %v1361
        %v1363 = vrot.slane %v1295, %v1362
        %v1365 = vunpack.c.l.s4 1983009808
        %v1366 = vunpack.c.0.s8 %v1365
        %v1367 = vlaneseq
        %v1368 = vshrl.u32 %v1367, 7
        %v1369 = vsub.s32 %v1366, %v1368
        %v1370 = vrot.slane %v1296, %v1369
        %v1372 = vunpack.c.l.s4 1983009808
        %v1373 = vunpack.c.0.s8 %v1372
        %v1374 = vlaneseq
        %v1375 = vshrl.u32 %v1374, 7
        %v1376 = vsub.s32 %v1373, %v1375
        %v1377 = vrot.slane %v1297, %v1376
        %v1378 = vunpack.c.l.b16 %v1328
        %v1379 = vunpack.c.l.b16 %v1335
        %v1380 = vunpack.c.l.b16 %v1342
        %v1381 = vunpack.c.l.b16 %v1349
        %v1382 = vunpack.c.l.b16 %v1356
        %v1383 = vunpack.c.l.b16 %v1363
        %v1384 = vunpack.c.l.b16 %v1370
        %v1385 = vunpack.c.l.b16 %v1377
        %v1386 = vrot.slane %v1378, 2
        %v1387 = vrot.slane %v1379, 1
        %v1388 = vsel %vm585, %v1387, %v1386
        %v1389 = vsel %vm588, %v1380, %v1388
        %v1390 = vrot.slane %v1381, 7
        %v1391 = vsel %vm591, %v1390, %v1389
        %v1392 = vrot.slane %v1382, 6
        %v1393 = vsel %vm594, %v1392, %v1391
        %v1394 = vrot.slane %v1383, 5
        %v1395 = vsel %vm597, %v1394, %v1393
        %v1396 = vrot.slane %v1384, 4
        %v1397 = vsel %vm600, %v1396, %v1395
        %v1398 = vrot.slane %v1385, 3
        %v1399 = vsel %vm603, %v1398, %v1397
        %v1400 = vpack.c.b16 %v1399, %v1399
        %v1410 = vunpack.c.l.s4 1983009808
        %v1411 = vunpack.c.0.s8 %v1410
        %v1412 = vlaneseq
        %v1413 = vshrl.u32 %v1412, 7
        %v1414 = vsub.s32 %v1411, %v1413
        %v1415 = vrot.slane %v1298, %v1414
        %v1417 = vunpack.c.l.s4 1983009808
        %v1418 = vunpack.c.0.s8 %v1417
        %v1419 = vlaneseq
        %v1420 = vshrl.u32 %v1419, 7
        %v1421 = vsub.s32 %v1418, %v1420
        %v1422 = vrot.slane %v1299, %v1421
        %v1424 = vunpack.c.l.s4 1983009808
        %v1425 = vunpack.c.0.s8 %v1424
        %v1426 = vlaneseq
        %v1427 = vshrl.u32 %v1426, 7
        %v1428 = vsub.s32 %v1425, %v1427
        %v1429 = vrot.slane %v1300, %v1428
        %v1431 = vunpack.c.l.s4 1983009808
        %v1432 = vunpack.c.0.s8 %v1431
        %v1433 = vlaneseq
        %v1434 = vshrl.u32 %v1433, 7
        %v1435 = vsub.s32 %v1432, %v1434
        %v1436 = vrot.slane %v1301, %v1435
        %v1438 = vunpack.c.l.s4 1983009808
        %v1439 = vunpack.c.0.s8 %v1438
        %v1440 = vlaneseq
        %v1441 = vshrl.u32 %v1440, 7
        %v1442 = vsub.s32 %v1439, %v1441
        %v1443 = vrot.slane %v1302, %v1442
        %v1445 = vunpack.c.l.s4 1983009808
        %v1446 = vunpack.c.0.s8 %v1445
        %v1447 = vlaneseq
        %v1448 = vshrl.u32 %v1447, 7
        %v1449 = vsub.s32 %v1446, %v1448
        %v1450 = vrot.slane %v1303, %v1449
        %v1452 = vunpack.c.l.s4 1983009808
        %v1453 = vunpack.c.0.s8 %v1452
        %v1454 = vlaneseq
        %v1455 = vshrl.u32 %v1454, 7
        %v1456 = vsub.s32 %v1453, %v1455
        %v1457 = vrot.slane %v1304, %v1456
        %v1459 = vunpack.c.l.s4 1983009808
        %v1460 = vunpack.c.0.s8 %v1459
        %v1461 = vlaneseq
        %v1462 = vshrl.u32 %v1461, 7
        %v1463 = vsub.s32 %v1460, %v1462
        %v1464 = vrot.slane %v1305, %v1463
        %v1465 = vunpack.c.l.b16 %v1415
        %v1466 = vunpack.c.l.b16 %v1422
        %v1467 = vunpack.c.l.b16 %v1429
        %v1468 = vunpack.c.l.b16 %v1436
        %v1469 = vunpack.c.l.b16 %v1443
        %v1470 = vunpack.c.l.b16 %v1450
        %v1471 = vunpack.c.l.b16 %v1457
        %v1472 = vunpack.c.l.b16 %v1464
        %v1473 = vrot.slane %v1465, 2
        %v1474 = vrot.slane %v1466, 1
        %v1475 = vsel %vm585, %v1474, %v1473
        %v1476 = vsel %vm588, %v1467, %v1475
        %v1477 = vrot.slane %v1468, 7
        %v1478 = vsel %vm591, %v1477, %v1476
        %v1479 = vrot.slane %v1469, 6
        %v1480 = vsel %vm594, %v1479, %v1478
        %v1481 = vrot.slane %v1470, 5
        %v1482 = vsel %vm597, %v1481, %v1480
        %v1483 = vrot.slane %v1471, 4
        %v1484 = vsel %vm600, %v1483, %v1482
        %v1485 = vrot.slane %v1472, 3
        %v1486 = vsel %vm603, %v1485, %v1484
        %v1487 = vpack.c.b16 %v1486, %v1486
        %v1489 = vsel %vm693, %v1400, 0
        %v1492 = vsel %vm693, %v1487, 0
        %1494 = vmatprep.subr.bf16.mxu0 0
        %1495 = vmatpush1.bf16.xpose.msra.mxu0 %v1492
        %1496 = vmatprep.subr.bf16.mxu0 0
        %1497 = vmatpush1.bf16.xpose.msra.mxu0 0
        %1498 = vmatprep.subr.bf16.mxu0 0
        %1499 = vmatpush1.bf16.xpose.msra.mxu0 0
        %1500 = vmatprep.subr.bf16.mxu0 0
        %1501 = vmatpush1.bf16.xpose.msra.mxu0 0
        %1502 = vmatprep.subr.bf16.mxu0 0
        %1503 = vmatpush1.bf16.xpose.msra.mxu0 0
        %1504 = vmatprep.subr.bf16.mxu0 0
        %1505 = vmatpush1.bf16.xpose.msra.mxu0 0
        %1506 = vmatprep.subr.bf16.mxu0 0
        %1507 = vmatpush1.bf16.xpose.msra.mxu0 0
        %1508 = vmatprep.subr.bf16.mxu0 0
        %1509 = vmatpush1.bf16.xpose.msra.mxu0 0
        %1510 = vmatprep.subr.bf16.mxu0 0
        %1511 = vmatpush1.bf16.xpose.msra.mxu0 0
        %1512 = vmatprep.subr.bf16.mxu0 0
        %1513 = vmatpush1.bf16.xpose.msra.mxu0 0
        %1514 = vmatprep.subr.bf16.mxu0 0
        %1515 = vmatpush1.bf16.xpose.msra.mxu0 0
        %1516 = vmatprep.subr.bf16.mxu0 0
        %1517 = vmatpush1.bf16.xpose.msra.mxu0 0
        %1518 = vmatprep.subr.bf16.mxu0 0
        %1519 = vmatpush1.bf16.xpose.msra.mxu0 0
        %1520 = vmatprep.subr.bf16.mxu0 0
        %1521 = vmatpush1.bf16.xpose.msra.mxu0 0
        %1522 = vmatprep.subr.bf16.mxu0 0
        %1523 = vmatpush1.bf16.xpose.msra.mxu0 0
        %1524 = vmatprep.subr.bf16.mxu0 0
        %1525 = vmatpush1.bf16.xpose.msra.mxu0 0
        %1526 = vmatprep.mubr.bf16.mxu0 0
        %1527 = vmatmul.mubr.bf16.gmra.mrb[0].mxu0 %v1489
        %v1528 = vpop.f32.mrb[0].mxu0
        %v1529 = vadd.f32 0.0, %v1528
        %v1530 = vpop.f32.mrb[0].mxu0
        %v1531 = vpop.f32.mrb[0].mxu0
        %v1532 = vpop.f32.mrb[0].mxu0
        %1533 = vdwg.mxu0
        %v1534 = vsel %vm693, %v1529, -inf
        %1535 = vmax.xlane.f32.xlu0 %v1534
        %v1536 = vpop.xlane.xlu0 %1535
        %v1537 = vsub.f32 %v1529, %v1536
        %v1538 = vmul.f32 %v1537, 1.442695
        %v1539 = vpow.pop %v1538
        %v1540 = vsel %vm693, %v1539, 0.0
        %1541 = vadd.xlane.f32.xlu0 %v1540
        %v1542 = vpop.xlane.xlu0 %1541
        %v1543 = vrcp.pop %v1542
        %v1544 = vmul.f32 %v1539, %v1543
        %s1545 = scalar_lea.vmem %s469, 16 [#allocation5]
        %1546 = vst.msk [vmem:[%s1545] sm:$0xff] %vm693, %v1544
        %v1547 = vpack.c.bf16 %v1544, %v1544
        %v1557 = vunpack.c.l.s4 1983009808
        %v1558 = vunpack.c.0.s8 %v1557
        %v1559 = vlaneseq
        %v1560 = vshrl.u32 %v1559, 7
        %v1561 = vsub.s32 %v1558, %v1560
        %v1562 = vrot.slane %v1306, %v1561
        %v1564 = vunpack.c.l.s4 1983009808
        %v1565 = vunpack.c.0.s8 %v1564
        %v1566 = vlaneseq
        %v1567 = vshrl.u32 %v1566, 7
        %v1568 = vsub.s32 %v1565, %v1567
        %v1569 = vrot.slane %v1307, %v1568
        %v1571 = vunpack.c.l.s4 1983009808
        %v1572 = vunpack.c.0.s8 %v1571
        %v1573 = vlaneseq
        %v1574 = vshrl.u32 %v1573, 7
        %v1575 = vsub.s32 %v1572, %v1574
        %v1576 = vrot.slane %v1308, %v1575
        %v1578 = vunpack.c.l.s4 1983009808
        %v1579 = vunpack.c.0.s8 %v1578
        %v1580 = vlaneseq
        %v1581 = vshrl.u32 %v1580, 7
        %v1582 = vsub.s32 %v1579, %v1581
        %v1583 = vrot.slane %v1309, %v1582
        %v1585 = vunpack.c.l.s4 1983009808
        %v1586 = vunpack.c.0.s8 %v1585
        %v1587 = vlaneseq
        %v1588 = vshrl.u32 %v1587, 7
        %v1589 = vsub.s32 %v1586, %v1588
        %v1590 = vrot.slane %v1310, %v1589
        %v1592 = vunpack.c.l.s4 1983009808
        %v1593 = vunpack.c.0.s8 %v1592
        %v1594 = vlaneseq
        %v1595 = vshrl.u32 %v1594, 7
        %v1596 = vsub.s32 %v1593, %v1595
        %v1597 = vrot.slane %v1311, %v1596
        %v1599 = vunpack.c.l.s4 1983009808
        %v1600 = vunpack.c.0.s8 %v1599
        %v1601 = vlaneseq
        %v1602 = vshrl.u32 %v1601, 7
        %v1603 = vsub.s32 %v1600, %v1602
        %v1604 = vrot.slane %v1312, %v1603
        %v1606 = vunpack.c.l.s4 1983009808
        %v1607 = vunpack.c.0.s8 %v1606
        %v1608 = vlaneseq
        %v1609 = vshrl.u32 %v1608, 7
        %v1610 = vsub.s32 %v1607, %v1609
        %v1611 = vrot.slane %v1313, %v1610
        %v1612 = vunpack.c.l.b16 %v1562
        %v1613 = vunpack.c.l.b16 %v1569
        %v1614 = vunpack.c.l.b16 %v1576
        %v1615 = vunpack.c.l.b16 %v1583
        %v1616 = vunpack.c.l.b16 %v1590
        %v1617 = vunpack.c.l.b16 %v1597
        %v1618 = vunpack.c.l.b16 %v1604
        %v1619 = vunpack.c.l.b16 %v1611
        %v1620 = vrot.slane %v1612, 2
        %v1621 = vrot.slane %v1613, 1
        %v1622 = vsel %vm585, %v1621, %v1620
        %v1623 = vsel %vm588, %v1614, %v1622
        %v1624 = vrot.slane %v1615, 7
        %v1625 = vsel %vm591, %v1624, %v1623
        %v1626 = vrot.slane %v1616, 6
        %v1627 = vsel %vm594, %v1626, %v1625
        %v1628 = vrot.slane %v1617, 5
        %v1629 = vsel %vm597, %v1628, %v1627
        %v1630 = vrot.slane %v1618, 4
        %v1631 = vsel %vm600, %v1630, %v1629
        %v1632 = vrot.slane %v1619, 3
        %v1633 = vsel %vm603, %v1632, %v1631
        %v1634 = vpack.c.b16 %v1633, %v1633
        %v1636 = vsel %vm693, %v1547, 0
        %v1639 = vsel %vm843, %v1634, 0
        %1641 = vmatprep.subr.bf16.mxu0 0
        %1642 = vmatpush1.bf16.msra.mxu0 %v1639
        %1643 = vmatprep.subr.bf16.mxu0 0
        %1644 = vmatpush1.bf16.msra.mxu0 0
        %1645 = vmatprep.subr.bf16.mxu0 0
        %1646 = vmatpush1.bf16.msra.mxu0 0
        %1647 = vmatprep.subr.bf16.mxu0 0
        %1648 = vmatpush1.bf16.msra.mxu0 0
        %1649 = vmatprep.subr.bf16.mxu0 0
        %1650 = vmatpush1.bf16.msra.mxu0 0
        %1651 = vmatprep.subr.bf16.mxu0 0
        %1652 = vmatpush1.bf16.msra.mxu0 0
        %1653 = vmatprep.subr.bf16.mxu0 0
        %1654 = vmatpush1.bf16.msra.mxu0 0
        %1655 = vmatprep.subr.bf16.mxu0 0
        %1656 = vmatpush1.bf16.msra.mxu0 0
        %1657 = vmatprep.subr.bf16.mxu0 0
        %1658 = vmatpush1.bf16.msra.mxu0 0
        %1659 = vmatprep.subr.bf16.mxu0 0
        %1660 = vmatpush1.bf16.msra.mxu0 0
        %1661 = vmatprep.subr.bf16.mxu0 0
        %1662 = vmatpush1.bf16.msra.mxu0 0
        %1663 = vmatprep.subr.bf16.mxu0 0
        %1664 = vmatpush1.bf16.msra.mxu0 0
        %1665 = vmatprep.subr.bf16.mxu0 0
        %1666 = vmatpush1.bf16.msra.mxu0 0
        %1667 = vmatprep.subr.bf16.mxu0 0
        %1668 = vmatpush1.bf16.msra.mxu0 0
        %1669 = vmatprep.subr.bf16.mxu0 0
        %1670 = vmatpush1.bf16.msra.mxu0 0
        %1671 = vmatprep.subr.bf16.mxu0 0
        %1672 = vmatpush1.bf16.msra.mxu0 0
        %1673 = vmatprep.mubr.bf16.mxu0 0
        %1674 = vmatmul.mubr.bf16.gmra.mrb[0].mxu0 %v1636
        %v1675 = vpop.f32.mrb[0].mxu0
        %v1676 = vadd.f32 0.0, %v1675
        %v1677 = vpop.f32.mrb[0].mxu0
        %v1678 = vpop.f32.mrb[0].mxu0
        %v1679 = vpop.f32.mrb[0].mxu0
        %1680 = vdwg.mxu0
        %v1681 = vpack.c.bf16 %v1676, %v1676
        %v1683 = vunpack.c.l.b16 %v1681
        %v1684 = vpack.c.b16 %v1683, %v1683
        %1685 = vrot.lane.b32.xlu0 %v1684, 16
        %v1686 = vpop.permute.xlu0 %1685
        %vm1688 = vcmask 191616
        %1689 = vst.msk [vmem:[%s486] sm:$0xf] %vm1688, %v1686
        %v1690 = vld [vmem:[%s427] sm:$0x2]
        %v1691 = vld [vmem:[%s427 + $0x2] sm:$0x2]
        %v1692 = vld [vmem:[%s427 + $0x4] sm:$0x2]
        %v1693 = vld [vmem:[%s427 + $0x6] sm:$0x2]
        %v1694 = vld [vmem:[%s427 + $0x8] sm:$0x2]
        %v1695 = vld [vmem:[%s427 + $0xa] sm:$0x2]
        %v1696 = vld [vmem:[%s427 + $0xc] sm:$0x2]
        %v1697 = vld [vmem:[%s427 + $0xe] sm:$0x2]
        %v1698 = vld [vmem:[%s434] sm:$0x2]
        %v1699 = vld [vmem:[%s434 + $0x2] sm:$0x2]
        %v1700 = vld [vmem:[%s434 + $0x4] sm:$0x2]
        %v1701 = vld [vmem:[%s434 + $0x6] sm:$0x2]
        %v1702 = vld [vmem:[%s434 + $0x8] sm:$0x2]
        %v1703 = vld [vmem:[%s434 + $0xa] sm:$0x2]
        %v1704 = vld [vmem:[%s434 + $0xc] sm:$0x2]
        %v1705 = vld [vmem:[%s434 + $0xe] sm:$0x2]
        %v1706 = vld [vmem:[%s441] sm:$0x2]
        %v1707 = vld [vmem:[%s441 + $0x2] sm:$0x2]
        %v1708 = vld [vmem:[%s441 + $0x4] sm:$0x2]
        %v1709 = vld [vmem:[%s441 + $0x6] sm:$0x2]
        %v1710 = vld [vmem:[%s441 + $0x8] sm:$0x2]
        %v1711 = vld [vmem:[%s441 + $0xa] sm:$0x2]
        %v1712 = vld [vmem:[%s441 + $0xc] sm:$0x2]
        %v1713 = vld [vmem:[%s441 + $0xe] sm:$0x2]
        %v1723 = vunpack.c.l.s4 1983009808
        %v1724 = vunpack.c.0.s8 %v1723
        %v1725 = vlaneseq
        %v1726 = vshrl.u32 %v1725, 7
        %v1727 = vsub.s32 %v1724, %v1726
        %v1728 = vrot.slane %v1690, %v1727
        %v1730 = vunpack.c.l.s4 1983009808
        %v1731 = vunpack.c.0.s8 %v1730
        %v1732 = vlaneseq
        %v1733 = vshrl.u32 %v1732, 7
        %v1734 = vsub.s32 %v1731, %v1733
        %v1735 = vrot.slane %v1691, %v1734
        %v1737 = vunpack.c.l.s4 1983009808
        %v1738 = vunpack.c.0.s8 %v1737
        %v1739 = vlaneseq
        %v1740 = vshrl.u32 %v1739, 7
        %v1741 = vsub.s32 %v1738, %v1740
        %v1742 = vrot.slane %v1692, %v1741
        %v1744 = vunpack.c.l.s4 1983009808
        %v1745 = vunpack.c.0.s8 %v1744
        %v1746 = vlaneseq
        %v1747 = vshrl.u32 %v1746, 7
        %v1748 = vsub.s32 %v1745, %v1747
        %v1749 = vrot.slane %v1693, %v1748
        %v1751 = vunpack.c.l.s4 1983009808
        %v1752 = vunpack.c.0.s8 %v1751
        %v1753 = vlaneseq
        %v1754 = vshrl.u32 %v1753, 7
        %v1755 = vsub.s32 %v1752, %v1754
        %v1756 = vrot.slane %v1694, %v1755
        %v1758 = vunpack.c.l.s4 1983009808
        %v1759 = vunpack.c.0.s8 %v1758
        %v1760 = vlaneseq
        %v1761 = vshrl.u32 %v1760, 7
        %v1762 = vsub.s32 %v1759, %v1761
        %v1763 = vrot.slane %v1695, %v1762
        %v1765 = vunpack.c.l.s4 1983009808
        %v1766 = vunpack.c.0.s8 %v1765
        %v1767 = vlaneseq
        %v1768 = vshrl.u32 %v1767, 7
        %v1769 = vsub.s32 %v1766, %v1768
        %v1770 = vrot.slane %v1696, %v1769
        %v1772 = vunpack.c.l.s4 1983009808
        %v1773 = vunpack.c.0.s8 %v1772
        %v1774 = vlaneseq
        %v1775 = vshrl.u32 %v1774, 7
        %v1776 = vsub.s32 %v1773, %v1775
        %v1777 = vrot.slane %v1697, %v1776
        %v1778 = vunpack.c.l.b16 %v1728
        %v1779 = vunpack.c.l.b16 %v1735
        %v1780 = vunpack.c.l.b16 %v1742
        %v1781 = vunpack.c.l.b16 %v1749
        %v1782 = vunpack.c.l.b16 %v1756
        %v1783 = vunpack.c.l.b16 %v1763
        %v1784 = vunpack.c.l.b16 %v1770
        %v1785 = vunpack.c.l.b16 %v1777
        %v1786 = vrot.slane %v1778, 3
        %v1787 = vrot.slane %v1779, 2
        %v1788 = vsel %vm585, %v1787, %v1786
        %v1789 = vrot.slane %v1780, 1
        %v1790 = vsel %vm588, %v1789, %v1788
        %v1791 = vsel %vm591, %v1781, %v1790
        %v1792 = vrot.slane %v1782, 7
        %v1793 = vsel %vm594, %v1792, %v1791
        %v1794 = vrot.slane %v1783, 6
        %v1795 = vsel %vm597, %v1794, %v1793
        %v1796 = vrot.slane %v1784, 5
        %v1797 = vsel %vm600, %v1796, %v1795
        %v1798 = vrot.slane %v1785, 4
        %v1799 = vsel %vm603, %v1798, %v1797
        %v1800 = vpack.c.b16 %v1799, %v1799
        %v1810 = vunpack.c.l.s4 1983009808
        %v1811 = vunpack.c.0.s8 %v1810
        %v1812 = vlaneseq
        %v1813 = vshrl.u32 %v1812, 7
        %v1814 = vsub.s32 %v1811, %v1813
        %v1815 = vrot.slane %v1698, %v1814
        %v1817 = vunpack.c.l.s4 1983009808
        %v1818 = vunpack.c.0.s8 %v1817
        %v1819 = vlaneseq
        %v1820 = vshrl.u32 %v1819, 7
        %v1821 = vsub.s32 %v1818, %v1820
        %v1822 = vrot.slane %v1699, %v1821
        %v1824 = vunpack.c.l.s4 1983009808
        %v1825 = vunpack.c.0.s8 %v1824
        %v1826 = vlaneseq
        %v1827 = vshrl.u32 %v1826, 7
        %v1828 = vsub.s32 %v1825, %v1827
        %v1829 = vrot.slane %v1700, %v1828
        %v1831 = vunpack.c.l.s4 1983009808
        %v1832 = vunpack.c.0.s8 %v1831
        %v1833 = vlaneseq
        %v1834 = vshrl.u32 %v1833, 7
        %v1835 = vsub.s32 %v1832, %v1834
        %v1836 = vrot.slane %v1701, %v1835
        %v1838 = vunpack.c.l.s4 1983009808
        %v1839 = vunpack.c.0.s8 %v1838
        %v1840 = vlaneseq
        %v1841 = vshrl.u32 %v1840, 7
        %v1842 = vsub.s32 %v1839, %v1841
        %v1843 = vrot.slane %v1702, %v1842
        %v1845 = vunpack.c.l.s4 1983009808
        %v1846 = vunpack.c.0.s8 %v1845
        %v1847 = vlaneseq
        %v1848 = vshrl.u32 %v1847, 7
        %v1849 = vsub.s32 %v1846, %v1848
        %v1850 = vrot.slane %v1703, %v1849
        %v1852 = vunpack.c.l.s4 1983009808
        %v1853 = vunpack.c.0.s8 %v1852
        %v1854 = vlaneseq
        %v1855 = vshrl.u32 %v1854, 7
        %v1856 = vsub.s32 %v1853, %v1855
        %v1857 = vrot.slane %v1704, %v1856
        %v1859 = vunpack.c.l.s4 1983009808
        %v1860 = vunpack.c.0.s8 %v1859
        %v1861 = vlaneseq
        %v1862 = vshrl.u32 %v1861, 7
        %v1863 = vsub.s32 %v1860, %v1862
        %v1864 = vrot.slane %v1705, %v1863
        %v1865 = vunpack.c.l.b16 %v1815
        %v1866 = vunpack.c.l.b16 %v1822
        %v1867 = vunpack.c.l.b16 %v1829
        %v1868 = vunpack.c.l.b16 %v1836
        %v1869 = vunpack.c.l.b16 %v1843
        %v1870 = vunpack.c.l.b16 %v1850
        %v1871 = vunpack.c.l.b16 %v1857
        %v1872 = vunpack.c.l.b16 %v1864
        %v1873 = vrot.slane %v1865, 3
        %v1874 = vrot.slane %v1866, 2
        %v1875 = vsel %vm585, %v1874, %v1873
        %v1876 = vrot.slane %v1867, 1
        %v1877 = vsel %vm588, %v1876, %v1875
        %v1878 = vsel %vm591, %v1868, %v1877
        %v1879 = vrot.slane %v1869, 7
        %v1880 = vsel %vm594, %v1879, %v1878
        %v1881 = vrot.slane %v1870, 6
        %v1882 = vsel %vm597, %v1881, %v1880
        %v1883 = vrot.slane %v1871, 5
        %v1884 = vsel %vm600, %v1883, %v1882
        %v1885 = vrot.slane %v1872, 4
        %v1886 = vsel %vm603, %v1885, %v1884
        %v1887 = vpack.c.b16 %v1886, %v1886
        %v1889 = vsel %vm693, %v1800, 0
        %v1892 = vsel %vm693, %v1887, 0
        %1894 = vmatprep.subr.bf16.mxu0 0
        %1895 = vmatpush1.bf16.xpose.msra.mxu0 %v1892
        %1896 = vmatprep.subr.bf16.mxu0 0
        %1897 = vmatpush1.bf16.xpose.msra.mxu0 0
        %1898 = vmatprep.subr.bf16.mxu0 0
        %1899 = vmatpush1.bf16.xpose.msra.mxu0 0
        %1900 = vmatprep.subr.bf16.mxu0 0
        %1901 = vmatpush1.bf16.xpose.msra.mxu0 0
        %1902 = vmatprep.subr.bf16.mxu0 0
        %1903 = vmatpush1.bf16.xpose.msra.mxu0 0
        %1904 = vmatprep.subr.bf16.mxu0 0
        %1905 = vmatpush1.bf16.xpose.msra.mxu0 0
        %1906 = vmatprep.subr.bf16.mxu0 0
        %1907 = vmatpush1.bf16.xpose.msra.mxu0 0
        %1908 = vmatprep.subr.bf16.mxu0 0
        %1909 = vmatpush1.bf16.xpose.msra.mxu0 0
        %1910 = vmatprep.subr.bf16.mxu0 0
        %1911 = vmatpush1.bf16.xpose.msra.mxu0 0
        %1912 = vmatprep.subr.bf16.mxu0 0
        %1913 = vmatpush1.bf16.xpose.msra.mxu0 0
        %1914 = vmatprep.subr.bf16.mxu0 0
        %1915 = vmatpush1.bf16.xpose.msra.mxu0 0
        %1916 = vmatprep.subr.bf16.mxu0 0
        %1917 = vmatpush1.bf16.xpose.msra.mxu0 0
        %1918 = vmatprep.subr.bf16.mxu0 0
        %1919 = vmatpush1.bf16.xpose.msra.mxu0 0
        %1920 = vmatprep.subr.bf16.mxu0 0
        %1921 = vmatpush1.bf16.xpose.msra.mxu0 0
        %1922 = vmatprep.subr.bf16.mxu0 0
        %1923 = vmatpush1.bf16.xpose.msra.mxu0 0
        %1924 = vmatprep.subr.bf16.mxu0 0
        %1925 = vmatpush1.bf16.xpose.msra.mxu0 0
        %1926 = vmatprep.mubr.bf16.mxu0 0
        %1927 = vmatmul.mubr.bf16.gmra.mrb[0].mxu0 %v1889
        %v1928 = vpop.f32.mrb[0].mxu0
        %v1929 = vadd.f32 0.0, %v1928
        %v1930 = vpop.f32.mrb[0].mxu0
        %v1931 = vpop.f32.mrb[0].mxu0
        %v1932 = vpop.f32.mrb[0].mxu0
        %1933 = vdwg.mxu0
        %v1934 = vsel %vm693, %v1929, -inf
        %1935 = vmax.xlane.f32.xlu0 %v1934
        %v1936 = vpop.xlane.xlu0 %1935
        %v1937 = vsub.f32 %v1929, %v1936
        %v1938 = vmul.f32 %v1937, 1.442695
        %v1939 = vpow.pop %v1938
        %v1940 = vsel %vm693, %v1939, 0.0
        %1941 = vadd.xlane.f32.xlu0 %v1940
        %v1942 = vpop.xlane.xlu0 %1941
        %v1943 = vrcp.pop %v1942
        %v1944 = vmul.f32 %v1939, %v1943
        %s1945 = scalar_lea.vmem %s469, 24 [#allocation5]
        %1946 = vst.msk [vmem:[%s1945] sm:$0xff] %vm693, %v1944
        %v1947 = vpack.c.bf16 %v1944, %v1944
        %v1957 = vunpack.c.l.s4 1983009808
        %v1958 = vunpack.c.0.s8 %v1957
        %v1959 = vlaneseq
        %v1960 = vshrl.u32 %v1959, 7
        %v1961 = vsub.s32 %v1958, %v1960
        %v1962 = vrot.slane %v1706, %v1961
        %v1964 = vunpack.c.l.s4 1983009808
        %v1965 = vunpack.c.0.s8 %v1964
        %v1966 = vlaneseq
        %v1967 = vshrl.u32 %v1966, 7
        %v1968 = vsub.s32 %v1965, %v1967
        %v1969 = vrot.slane %v1707, %v1968
        %v1971 = vunpack.c.l.s4 1983009808
        %v1972 = vunpack.c.0.s8 %v1971
        %v1973 = vlaneseq
        %v1974 = vshrl.u32 %v1973, 7
        %v1975 = vsub.s32 %v1972, %v1974
        %v1976 = vrot.slane %v1708, %v1975
        %v1978 = vunpack.c.l.s4 1983009808
        %v1979 = vunpack.c.0.s8 %v1978
        %v1980 = vlaneseq
        %v1981 = vshrl.u32 %v1980, 7
        %v1982 = vsub.s32 %v1979, %v1981
        %v1983 = vrot.slane %v1709, %v1982
        %v1985 = vunpack.c.l.s4 1983009808
        %v1986 = vunpack.c.0.s8 %v1985
        %v1987 = vlaneseq
        %v1988 = vshrl.u32 %v1987, 7
        %v1989 = vsub.s32 %v1986, %v1988
        %v1990 = vrot.slane %v1710, %v1989
        %v1992 = vunpack.c.l.s4 1983009808
        %v1993 = vunpack.c.0.s8 %v1992
        %v1994 = vlaneseq
        %v1995 = vshrl.u32 %v1994, 7
        %v1996 = vsub.s32 %v1993, %v1995
        %v1997 = vrot.slane %v1711, %v1996
        %v1999 = vunpack.c.l.s4 1983009808
        %v2000 = vunpack.c.0.s8 %v1999
        %v2001 = vlaneseq
        %v2002 = vshrl.u32 %v2001, 7
        %v2003 = vsub.s32 %v2000, %v2002
        %v2004 = vrot.slane %v1712, %v2003
        %v2006 = vunpack.c.l.s4 1983009808
        %v2007 = vunpack.c.0.s8 %v2006
        %v2008 = vlaneseq
        %v2009 = vshrl.u32 %v2008, 7
        %v2010 = vsub.s32 %v2007, %v2009
        %v2011 = vrot.slane %v1713, %v2010
        %v2012 = vunpack.c.l.b16 %v1962
        %v2013 = vunpack.c.l.b16 %v1969
        %v2014 = vunpack.c.l.b16 %v1976
        %v2015 = vunpack.c.l.b16 %v1983
        %v2016 = vunpack.c.l.b16 %v1990
        %v2017 = vunpack.c.l.b16 %v1997
        %v2018 = vunpack.c.l.b16 %v2004
        %v2019 = vunpack.c.l.b16 %v2011
        %v2020 = vrot.slane %v2012, 3
        %v2021 = vrot.slane %v2013, 2
        %v2022 = vsel %vm585, %v2021, %v2020
        %v2023 = vrot.slane %v2014, 1
        %v2024 = vsel %vm588, %v2023, %v2022
        %v2025 = vsel %vm591, %v2015, %v2024
        %v2026 = vrot.slane %v2016, 7
        %v2027 = vsel %vm594, %v2026, %v2025
        %v2028 = vrot.slane %v2017, 6
        %v2029 = vsel %vm597, %v2028, %v2027
        %v2030 = vrot.slane %v2018, 5
        %v2031 = vsel %vm600, %v2030, %v2029
        %v2032 = vrot.slane %v2019, 4
        %v2033 = vsel %vm603, %v2032, %v2031
        %v2034 = vpack.c.b16 %v2033, %v2033
        %v2036 = vsel %vm693, %v1947, 0
        %v2039 = vsel %vm843, %v2034, 0
        %2041 = vmatprep.subr.bf16.mxu0 0
        %2042 = vmatpush1.bf16.msra.mxu0 %v2039
        %2043 = vmatprep.subr.bf16.mxu0 0
        %2044 = vmatpush1.bf16.msra.mxu0 0
        %2045 = vmatprep.subr.bf16.mxu0 0
        %2046 = vmatpush1.bf16.msra.mxu0 0
        %2047 = vmatprep.subr.bf16.mxu0 0
        %2048 = vmatpush1.bf16.msra.mxu0 0
        %2049 = vmatprep.subr.bf16.mxu0 0
        %2050 = vmatpush1.bf16.msra.mxu0 0
        %2051 = vmatprep.subr.bf16.mxu0 0
        %2052 = vmatpush1.bf16.msra.mxu0 0
        %2053 = vmatprep.subr.bf16.mxu0 0
        %2054 = vmatpush1.bf16.msra.mxu0 0
        %2055 = vmatprep.subr.bf16.mxu0 0
        %2056 = vmatpush1.bf16.msra.mxu0 0
        %2057 = vmatprep.subr.bf16.mxu0 0
        %2058 = vmatpush1.bf16.msra.mxu0 0
        %2059 = vmatprep.subr.bf16.mxu0 0
        %2060 = vmatpush1.bf16.msra.mxu0 0
        %2061 = vmatprep.subr.bf16.mxu0 0
        %2062 = vmatpush1.bf16.msra.mxu0 0
        %2063 = vmatprep.subr.bf16.mxu0 0
        %2064 = vmatpush1.bf16.msra.mxu0 0
        %2065 = vmatprep.subr.bf16.mxu0 0
        %2066 = vmatpush1.bf16.msra.mxu0 0
        %2067 = vmatprep.subr.bf16.mxu0 0
        %2068 = vmatpush1.bf16.msra.mxu0 0
        %2069 = vmatprep.subr.bf16.mxu0 0
        %2070 = vmatpush1.bf16.msra.mxu0 0
        %2071 = vmatprep.subr.bf16.mxu0 0
        %2072 = vmatpush1.bf16.msra.mxu0 0
        %2073 = vmatprep.mubr.bf16.mxu0 0
        %2074 = vmatmul.mubr.bf16.gmra.mrb[0].mxu0 %v2036
        %v2075 = vpop.f32.mrb[0].mxu0
        %v2076 = vadd.f32 0.0, %v2075
        %v2077 = vpop.f32.mrb[0].mxu0
        %v2078 = vpop.f32.mrb[0].mxu0
        %v2079 = vpop.f32.mrb[0].mxu0
        %2080 = vdwg.mxu0
        %v2081 = vpack.c.bf16 %v2076, %v2076
        %v2083 = vunpack.c.l.b16 %v2081
        %v2084 = vpack.c.b16 %v2083, %v2083
        %2085 = vrot.lane.b32.xlu0 %v2084, 24
        %v2086 = vpop.permute.xlu0 %2085
        %vm2088 = vcmask 257216
        %2089 = vst.msk [vmem:[%s486] sm:$0xf] %vm2088, %v2086
        %s2090 = sand.u32 %s121, 1
        %s2091 = scalar_lea.sflag [#allocation6], %s2090
        %s2092 = sand.u32 %s121, 1
        %s2093 = smul.addr %s2092, 32
        %s2094 = scalar_lea.vmem [#allocation5], %s2093
        %p2095 = scmp.lt.s32.totalorder %s23, 1
        %s2096 = scalar_select %p2095, %s23, 1
        %p2097 = scmp.lt.s32.totalorder %s24, 0
        %s2098 = scalar_select %p2097, %s24, 0
        %s2099 = sadd.s32 %s2098, %s2096
        %s2100 = smul.addr %s2099, 4
        %s2101 = scalar_lea.vmem %s4, %s2100
        // Predicated region
        $region156: #{attention_forward.4} parent=142 // pred_check
          %p2102 = pneg %p131
        $region157: #{attention_forward.4} parent=142 // pred_check_branch
          %2104 = sbr.rel (%p2102) target = $region159
        $region158: #{attention_forward.4} parent=142 // pred_region
          %s2106 = ssub.s32 512, 512
          %2107 = vsyncadd %s2091, %s2106
          %s2108 = smul.addr %s23, 4
          %s2109 = sadd.s32 %s24, %s2108
          %s2110 = smul.addr %s2109, 128
          %s2111 = scalar_lea.hbm %s3, %s2110
          %s2112 = sshll.u32 %s2094, 4
          %s2113 = int_to_ptr.vmem [resolvable:$true] %s2112
          %2118 = dma.vmem_to_hbm [thread:$0]  %s2113, 512, %s2111, %s2091, 128, 128, 8
        $region159: #{attention_forward.4} parent=142 // pred_fallthru
          _
        // Predicated region
        $region160: #{attention_forward.4} parent=142 // pred_check
          %p2119 = pneg %p159
        $region161: #{attention_forward.4} parent=142 // pred_check_branch
          %2121 = sbr.rel (%p2119) target = $region163
        $region162: #{attention_forward.4} parent=142 // pred_region
          _
        $region163: #{attention_forward.4} parent=142 // pred_fallthru
          _
      $region143: #{attention_forward.4} parent=5 // pred_fallthru
        _
      %p2122 = scmp.le.s32.totalorder 2, %s14
      // Predicated region
      $region164: #{attention_forward.4} parent=5 // pred_check
        %p2123 = pneg %p2122
      $region165: #{attention_forward.4} parent=5 // pred_check_branch
        %2125 = sbr.rel (%p2123) target = $region167
      $region166: #{attention_forward.4} parent=5 // pred_region
        %s2126 = ssub.s32 %s14, 2
        // Predicated region
        $region168: #{attention_forward.4} parent=166 // pred_check
          %p2127 = pneg %p137
        $region169: #{attention_forward.4} parent=166 // pred_check_branch
          %2129 = sbr.rel (%p2127) target = $region171
        $region170: #{attention_forward.4} parent=166 // pred_region
          %s2130 = sand.u32 %s122, 1
          %s2131 = scalar_lea.sflag [#allocation6], %s2130
          %s2132 = sand.u32 %s122, 1
          %s2133 = smul.addr %s2132, 32
          %s2134 = scalar_lea.vmem [#allocation5], %s2133
          %2135 = dma.done %s2131, 512
        $region171: #{attention_forward.4} parent=166 // pred_fallthru
          _
        // Predicated region
        $region172: #{attention_forward.4} parent=166 // pred_check
          %p2136 = pneg %p165
        $region173: #{attention_forward.4} parent=166 // pred_check_branch
          %2138 = sbr.rel (%p2136) target = $region175
        $region174: #{attention_forward.4} parent=166 // pred_region
          %p2139 = scmp.lt.s32.totalorder %s25, 1
          %s2140 = scalar_select %p2139, %s25, 1
          %p2141 = scmp.lt.s32.totalorder %s26, 0
          %s2142 = scalar_select %p2141, %s26, 0
          %s2143 = sadd.s32 %s2142, %s2140
          %s2144 = smul.addr %s2143, 4
          %s2145 = scalar_lea.vmem %s4, %s2144
        $region175: #{attention_forward.4} parent=166 // pred_fallthru
          _
      $region167: #{attention_forward.4} parent=5 // pred_fallthru
        _
    $region6: #{attention_forward.4} parent=1 // loop_footer
      %s18 = sadd.s32 1, %s14
    $region7: #{attention_forward.4} parent=1 // loop_footer_branch
      %13 = sbr.rel target = $region3
    $region8: #{attention_forward.4} parent=1 // loop_exit
      _
    %2146 = vsyncpa [#allocation6], 1
    %s2147 = scalar_lea.sflag [#allocation6], 1
    %2148 = vsyncpa %s2147, 1

</llo_original>
